<compile_context>
chip_gen: v7x
topology: tpu7x:2x2x1
jax: 0.10.0
libtpu: 0.0.40
codegen_flags: <defaults>
</compile_context>

<pallas_src>
import functools

import jax
import jax.numpy as jnp
from jax import lax
from jax.experimental import pallas as pl
from jax.experimental.pallas import tpu as pltpu

EPS = 1e-5        # nn.BatchNorm2d default eps
LANE = 128        # TPU lane width: pad output channels to a multiple of this
SUBLANE = 8
# VMEM budget: v7x has 64 MiB physical per TensorCore (32 MiB scoped default);
# 48 MiB leaves headroom there and trivially fits v5e/v6e's 128 MiB.
VMEM_LIMIT = 48 * 1024 * 1024


def _round_up(x, m):
    return ((x + m - 1) // m) * m


def _pass1_vmem_bytes(tr, K, Cp):
    # double-buffered bf16 patches + bf16 y tiles + (double-buffered) weight.
    return 2 * (tr * K * 2) + 2 * (tr * Cp * 2) + 2 * (K * Cp * 2)


def _tiling(R, K, Cp):
    """Pick (row_tile, cores).

    Larger row tiles amortize the ~0.35us/step grid overhead and lengthen DMA
    bursts; a leading size-2 'parallel' core axis lets v7x's two TensorCores
    split pass 1 (it is a no-op on single-TC v5e/v6e).
    """
    if R >= 2048:
        tr = 1024
    elif R >= 512:
        tr = 512
    else:
        tr = _round_up(R, 16)          # bf16 sublane pack for small problems
    # Keep the pass-1 working set comfortably inside the scoped-VMEM budget
    # (matters for large K, e.g. deeper ResNet stages, especially on v7x).
    while tr > 128 and _pass1_vmem_bytes(tr, K, Cp) > (3 * VMEM_LIMIT) // 4:
        tr //= 2
    steps = -(-R // tr)
    cores = 2 if steps >= 2 else 1
    return tr, cores


# ---------------------------------------------------------------------------
# Pass 1: tiled matmul (bf16 out) + per-core per-channel sum / sum-of-squares
# ---------------------------------------------------------------------------
def _matmul_stats_kernel(p_ref, w_ref, y_ref, sum_ref, sq_ref):
    # bf16 x bf16 -> f32 on the MXU; y is emitted in bf16 (HBM-bound pass),
    # the BatchNorm statistics stay in f32.
    y = jnp.dot(p_ref[...], w_ref[...], preferred_element_type=jnp.float32)
    y_ref[...] = y.astype(y_ref.dtype)

    @pl.when(pl.program_id(1) == 0)
    def _():
        sum_ref[...] = jnp.zeros_like(sum_ref)
        sq_ref[...] = jnp.zeros_like(sq_ref)

    # The (1, Cp) partial sums broadcast over the 8-sublane stats block (one
    # vreg either way); row 0 of each per-core block is read back in glue.
    sum_ref[...] = sum_ref[...] + jnp.sum(y, axis=0, keepdims=True)
    sq_ref[...] = sq_ref[...] + jnp.sum(y * y, axis=0, keepdims=True)


def matmul_stats(patches, w, tr, cores):
    """(Rp,K)@(K,Cp) -> bf16 y plus per-channel f32 sum / sumsq.

    Grid = (cores, steps_per_core).  Each core owns a disjoint row range and a
    private stats block, so the 'parallel' core axis is race-free on megacore
    parts.  NOTE: zero-padded rows (beyond the caller's true R) must stay
    zero-valued -- they then contribute 0 to sum/sumsq and the caller divides
    by the true R when forming BatchNorm statistics.
    """
    Rp, K = patches.shape
    Cp = w.shape[1]
    assert Rp % (cores * tr) == 0
    spc = Rp // (cores * tr)                          # steps per core

    return pl.pallas_call(
        _matmul_stats_kernel,
        out_shape=(jax.ShapeDtypeStruct((Rp, Cp), jnp.bfloat16),
                   jax.ShapeDtypeStruct((cores * SUBLANE, Cp), jnp.float32),
                   jax.ShapeDtypeStruct((cores * SUBLANE, Cp), jnp.float32)),
        grid=(cores, spc),
        in_specs=[pl.BlockSpec((tr, K), lambda c, i: (c * spc + i, 0)),
                  pl.BlockSpec((K, Cp), lambda c, i: (0, 0))],  # weight resident
        out_specs=(pl.BlockSpec((tr, Cp), lambda c, i: (c * spc + i, 0)),
                   pl.BlockSpec((SUBLANE, Cp), lambda c, i: (c, 0)),
                   pl.BlockSpec((SUBLANE, Cp), lambda c, i: (c, 0))),
        compiler_params=pltpu.CompilerParams(
            dimension_semantics=("parallel", "arbitrary"),
            vmem_limit_bytes=VMEM_LIMIT),
    )(patches, w)


def _reduce_stats(s):
    # per-core stats blocks are 8-sublane replicated; take row 0 of each core.
    return s[::SUBLANE].sum(axis=0, keepdims=True)    # (1, Cp)


# ---------------------------------------------------------------------------
# Pass 2: folded-BN normalize [+ residual (with its own folded BN)] [+ ReLU]
# ---------------------------------------------------------------------------
def _bn_act_kernel(y_ref, a_ref, b_ref, *rest, has_residual, apply_relu):
    if has_residual:
        r_ref, ra_ref, rb_ref, o_ref = rest
    else:
        (o_ref,) = rest
    out = y_ref[...].astype(jnp.float32) * a_ref[...] + b_ref[...]
    if has_residual:
        out = out + (r_ref[...].astype(jnp.float32) * ra_ref[...] + rb_ref[...])
    if apply_relu:
        out = jnp.maximum(out, 0.0)
    o_ref[...] = out.astype(o_ref.dtype)


def bn_act(y, scale, shift, tr, residual=None, r_scale=None, r_shift=None,
           apply_relu=True, out_dtype=jnp.float32):
    Rp, Cp = y.shape
    assert Rp % tr == 0
    grid = (Rp // tr,)
    has_res = residual is not None

    args = [y, scale, shift]
    in_specs = [pl.BlockSpec((tr, Cp), lambda i: (i, 0)),
                pl.BlockSpec((1, Cp), lambda i: (0, 0)),
                pl.BlockSpec((1, Cp), lambda i: (0, 0))]
    if has_res:
        args += [residual, r_scale, r_shift]
        in_specs += [pl.BlockSpec((tr, Cp), lambda i: (i, 0)),
                     pl.BlockSpec((1, Cp), lambda i: (0, 0)),
                     pl.BlockSpec((1, Cp), lambda i: (0, 0))]

    kernel = functools.partial(_bn_act_kernel, has_residual=has_res,
                               apply_relu=apply_relu)
    return pl.pallas_call(
        kernel,
        out_shape=jax.ShapeDtypeStruct((Rp, Cp), out_dtype),
        grid=grid,
        in_specs=in_specs,
        out_specs=pl.BlockSpec((tr, Cp), lambda i: (i, 0)),
        compiler_params=pltpu.CompilerParams(
            dimension_semantics=("parallel",),
            vmem_limit_bytes=VMEM_LIMIT),
    )(*args)


# ---------------------------------------------------------------------------
# Tiny glue: fold BN batch statistics into per-channel scale / shift
# ---------------------------------------------------------------------------
def _bn_affine(s, ss, gamma_p, beta_p, n_rows):
    # NOTE: E[y^2]-E[y]^2 with f32 accumulation; adequate at the 5e-2 test
    # tolerance of this bf16-MXU pipeline (see correctness notes).
    mean = s / n_rows
    var = jnp.maximum(ss / n_rows - mean * mean, 0.0)
    scale = gamma_p * lax.rsqrt(var + EPS)
    shift = beta_p - mean * scale
    return scale, shift


# ---------------------------------------------------------------------------
# JAX glue: im2col patch extraction (reshape/slice only, no compute)
# ---------------------------------------------------------------------------
def im2col(x, kh, kw, stride, pad):
    N, H, W, C = x.shape
    xp = jnp.pad(x, ((0, 0), (pad, pad), (pad, pad), (0, 0)))
    Ho = (H + 2 * pad - kh) // stride + 1
    Wo = (W + 2 * pad - kw) // stride + 1
    cols = []
    for i in range(kh):
        for j in range(kw):
            cols.append(xp[:, i:i + stride * Ho:stride,
                           j:j + stride * Wo:stride, :])
    patches = jnp.stack(cols, axis=3)              # (N, Ho, Wo, kh*kw, C)
    return patches.reshape(N * Ho * Wo, kh * kw * C), Ho, Wo


# ---------------------------------------------------------------------------
# BasicBlock forward (Pallas-backed)
# ---------------------------------------------------------------------------
def basic_block_forward(x_nhwc, params, stride):
    N, H, W, Cin = x_nhwc.shape
    w1 = params["conv1_w"]
    planes = w1.shape[-1]
    Cp = _round_up(planes, LANE)

    # conv1 patches (bf16 to halve im2col HBM traffic / feed MXU natively)
    p1, Ho, Wo = im2col(x_nhwc.astype(jnp.bfloat16), 3, 3, stride, 1)
    R = N * Ho * Wo
    K_max = 9 * max(Cin, planes)                   # conv2 has the larger K
    tr, cores = _tiling(R, K_max, Cp)
    Rp = _round_up(R, cores * tr)

    def pad_rows(a):
        # MUST pad with zeros: padded rows contribute 0 to BN sum/sumsq and
        # _bn_affine divides by the true R.
        return jnp.pad(a, ((0, Rp - a.shape[0]), (0, 0)))

    def pad_w(w2d):
        return jnp.pad(w2d, ((0, 0), (0, Cp - w2d.shape[1]))).astype(jnp.bfloat16)

    def pad_vec(v):
        return jnp.pad(v.reshape(1, -1),
                       ((0, 0), (0, Cp - v.shape[0]))).astype(jnp.float32)

    # ---- conv1 -> bn1 -> relu ------------------------------------------
    y1, s1, q1 = matmul_stats(pad_rows(p1), pad_w(w1.reshape(-1, planes)),
                              tr, cores)
    a1, b1 = _bn_affine(_reduce_stats(s1), _reduce_stats(q1),
                        pad_vec(params["bn1_g"]), pad_vec(params["bn1_b"]), R)
    out1 = bn_act(y1, a1, b1, tr, apply_relu=True, out_dtype=jnp.bfloat16)
    out1 = out1[:R, :planes].reshape(N, Ho, Wo, planes)

    # ---- shortcut branch -------------------------------------------------
    if stride != 1 or Cin != planes:
        ws = params["sc_w"].reshape(Cin, planes)
        sc_p = x_nhwc[:, ::stride, ::stride, :].reshape(-1, Cin)
        sc_p = sc_p.astype(jnp.bfloat16)
        ysc, ssc, qsc = matmul_stats(pad_rows(sc_p), pad_w(ws), tr, cores)
        r_a, r_b = _bn_affine(_reduce_stats(ssc), _reduce_stats(qsc),
                              pad_vec(params["sc_g"]), pad_vec(params["sc_b"]),
                              R)
        residual = ysc                                  # BN folded into pass 2
    else:
        # identity shortcut streamed as bf16 (halves the residual HBM stream
        # vs the previous f32 version; channel pad to Cp still applies).
        residual = jnp.pad(x_nhwc.reshape(R, Cin).astype(jnp.bfloat16),
                           ((0, Rp - R), (0, Cp - Cin)))
        r_a = jnp.ones((1, Cp), jnp.float32)
        r_b = jnp.zeros((1, Cp), jnp.float32)

    # ---- conv2 -> bn2 -> (+shortcut BN) -> relu  (fused pass 2) ---------
    p2, _, _ = im2col(out1, 3, 3, 1, 1)
    y2, s2, q2 = matmul_stats(pad_rows(p2),
                              pad_w(params["conv2_w"].reshape(-1, planes)),
                              tr, cores)
    a2, b2 = _bn_affine(_reduce_stats(s2), _reduce_stats(q2),
                        pad_vec(params["bn2_g"]), pad_vec(params["bn2_b"]), R)
    out = bn_act(y2, a2, b2, tr, residual=residual, r_scale=r_a, r_shift=r_b,
                 apply_relu=True, out_dtype=jnp.float32)
    return out[:R, :planes].reshape(N, Ho, Wo, planes)


# ---------------------------------------------------------------------------
# Pure-JAX reference (for correctness check)
# ---------------------------------------------------------------------------
def _ref_conv(x, w, stride, pad):
    return lax.conv_general_dilated(
        x, w, (stride, stride), ((pad, pad), (pad, pad)),
        dimension_numbers=("NHWC", "HWIO", "NHWC"))


def _ref_bn(y, g, b):
    mean = jnp.mean(y, axis=(0, 1, 2), keepdims=True)
    var = jnp.mean((y - mean) ** 2, axis=(0, 1, 2), keepdims=True)
    return (y - mean) * lax.rsqrt(var + EPS) * g + b


def ref_forward(x, params, stride):
    planes = params["conv1_w"].shape[-1]
    Cin = x.shape[-1]
    out = jax.nn.relu(_ref_bn(_ref_conv(x, params["conv1_w"], stride, 1),
                              params["bn1_g"], params["bn1_b"]))
    out = _ref_bn(_ref_conv(out, params["conv2_w"], 1, 1),
                  params["bn2_g"], params["bn2_b"])
    if stride != 1 or Cin != planes:
        sc = _ref_bn(_ref_conv(x, params["sc_w"], stride, 0),
                     params["sc_g"], params["sc_b"])
    else:
        sc = x
    return jax.nn.relu(out + sc)


# ---------------------------------------------------------------------------
if __name__ == "__main__":
    fwd = jax.jit(basic_block_forward, static_argnums=2)

    # ---- Test 1: conv shortcut path (stride=2, Cin != planes) ------------
    key = jax.random.PRNGKey(0)
    N, Cin, H, W = 2, 4, 16, 16
    planes, stride = 8, 2
    ks = jax.random.split(key, 8)
    params = {
        "conv1_w": jax.random.normal(ks[0], (3, 3, Cin, planes), jnp.float32) * 0.1,
        "bn1_g":   1.0 + 0.1 * jax.random.normal(ks[1], (planes,), jnp.float32),
        "bn1_b":   0.1 * jax.random.normal(ks[2], (planes,), jnp.float32),
        "conv2_w": jax.random.normal(ks[3], (3, 3, planes, planes), jnp.float32) * 0.1,
        "bn2_g":   1.0 + 0.1 * jax.random.normal(ks[4], (planes,), jnp.float32),
        "bn2_b":   0.1 * jax.random.normal(ks[5], (planes,), jnp.float32),
        "sc_w":    jax.random.normal(ks[6], (1, 1, Cin, planes), jnp.float32) * 0.1,
        "sc_g":    jnp.ones((planes,), jnp.float32),
        "sc_b":    jnp.zeros((planes,), jnp.float32),
    }
    # input (PyTorch would be NCHW [2,4,16,16]; we use the NHWC transpose)
    x_nchw = jax.random.normal(ks[7], (N, Cin, H, W), jnp.float32)
    x_nhwc = jnp.transpose(x_nchw, (0, 2, 3, 1))

    out = jax.block_until_ready(fwd(x_nhwc, params, stride))
    ref = jax.block_until_ready(ref_forward(x_nhwc, params, stride))
    assert out.shape == ref.shape == (N, H // stride, W // stride, planes)
    assert bool(jnp.allclose(out, ref, atol=5e-2, rtol=5e-2)), (
        "test1 mismatch, max abs diff = "
        f"{float(jnp.max(jnp.abs(out - ref)))}")

    # ---- Test 2: identity shortcut (stride=1, Cin==planes), 2-core split -
    N2, C2, H2, W2 = 4, 8, 16, 16           # R = 1024 -> 2 cores x 512 rows
    ks2 = jax.random.split(jax.random.PRNGKey(1), 7)
    params2 = {
        "conv1_w": jax.random.normal(ks2[0], (3, 3, C2, C2), jnp.float32) * 0.1,
        "bn1_g":   1.0 + 0.1 * jax.random.normal(ks2[1], (C2,), jnp.float32),
        "bn1_b":   0.1 * jax.random.normal(ks2[2], (C2,), jnp.float32),
        "conv2_w": jax.random.normal(ks2[3], (3, 3, C2, C2), jnp.float32) * 0.1,
        "bn2_g":   1.0 + 0.1 * jax.random.normal(ks2[4], (C2,), jnp.float32),
        "bn2_b":   0.1 * jax.random.normal(ks2[5], (C2,), jnp.float32),
    }
    x2 = jax.random.normal(ks2[6], (N2, H2, W2, C2), jnp.float32)

    out2 = jax.block_until_ready(fwd(x2, params2, 1))
    ref2 = jax.block_until_ready(ref_forward(x2, params2, 1))
    assert out2.shape == ref2.shape == (N2, H2, W2, C2)
    assert bool(jnp.allclose(out2, ref2, atol=5e-2, rtol=5e-2)), (
        "test2 mismatch, max abs diff = "
        f"{float(jnp.max(jnp.abs(out2 - ref2)))}")

    print("KERNEL_OK")
</pallas_src>

<mosaic_0001>
module attributes {stable_mosaic.version = 11 : i64} {
  func.func @_matmul_stats_kernel(%arg0: i32, %arg1: i32, %arg2: memref<128x36xbf16, #tpu.memory_space<vmem>>, %arg3: memref<36x128xbf16, #tpu.memory_space<vmem>>, %arg4: memref<128x128xbf16, #tpu.memory_space<vmem>>, %arg5: memref<8x128xf32, #tpu.memory_space<vmem>>, %arg6: memref<8x128xf32, #tpu.memory_space<vmem>>) attributes {dimension_semantics = [#tpu.dimension_semantics<parallel>, #tpu.dimension_semantics<arbitrary>], iteration_bounds = array<i64: 1, 1>, scalar_prefetch = 0 : i64, scratch_operands = 0 : i64, tpu.core_type = #tpu.core_type<tc>, window_params = [{transform_indices = @transform_0, window_bounds = array<i64: 128, 36>}, {pipeline_mode = #tpu.pipeline_mode<synchronous>, transform_indices = @transform_1, window_bounds = array<i64: 36, 128>}, {transform_indices = @transform_2, window_bounds = array<i64: 128, 128>}, {transform_indices = @transform_3, window_bounds = array<i64: 8, 128>}, {transform_indices = @transform_4, window_bounds = array<i64: 8, 128>}]} {
    %c0 = arith.constant 0 : index
    %c0_0 = arith.constant 0 : index
    %0 = vector.load %arg2[%c0, %c0_0] : memref<128x36xbf16, #tpu.memory_space<vmem>>, vector<128x36xbf16>
    %c0_1 = arith.constant 0 : index
    %c0_2 = arith.constant 0 : index
    %1 = vector.load %arg3[%c0_1, %c0_2] : memref<36x128xbf16, #tpu.memory_space<vmem>>, vector<36x128xbf16>
    %cst = arith.constant dense<0.000000e+00> : vector<128x128xf32>
    %2 = tpu.matmul %0, %1, %cst {dimension_numbers = #tpu.dot_dimension_numbers<[1], [0], [0], [1], [0, 0, 1, 1], [], []>} : vector<128x36xbf16>, vector<36x128xbf16>, vector<128x128xf32> -> vector<128x128xf32>
    %3 = arith.truncf %2 : vector<128x128xf32> to vector<128x128xbf16>
    %c0_3 = arith.constant 0 : index
    %c0_4 = arith.constant 0 : index
    %4 = vector.load %arg4[%c0_3, %c0_4] : memref<128x128xbf16, #tpu.memory_space<vmem>>, vector<128x128xbf16>
    tpu.vector_store %arg4[%c0_3, %c0_4], %3 {strides = array<i32>} : memref<128x128xbf16, #tpu.memory_space<vmem>>, vector<128x128xbf16>,
    %c0_i32 = arith.constant 0 : i32
    %5 = arith.cmpi eq, %arg1, %c0_i32 : i32
    %6 = arith.extui %5 : i1 to i32
    %c0_i32_5 = arith.constant 0 : i32
    %7 = arith.cmpi ne, %6, %c0_i32_5 : i32
    scf.if %7 {
      %cst_16 = arith.constant 0.000000e+00 : f32
      %21 = vector.broadcast %cst_16 : f32 to vector<8x128xf32>
      %c0_17 = arith.constant 0 : index
      %c0_18 = arith.constant 0 : index
      %22 = vector.load %arg5[%c0_17, %c0_18] : memref<8x128xf32, #tpu.memory_space<vmem>>, vector<8x128xf32>
      tpu.vector_store %arg5[%c0_17, %c0_18], %21 {strides = array<i32>} : memref<8x128xf32, #tpu.memory_space<vmem>>, vector<8x128xf32>,
      %cst_19 = arith.constant 0.000000e+00 : f32
      %23 = vector.broadcast %cst_19 : f32 to vector<8x128xf32>
      %c0_20 = arith.constant 0 : index
      %c0_21 = arith.constant 0 : index
      %24 = vector.load %arg6[%c0_20, %c0_21] : memref<8x128xf32, #tpu.memory_space<vmem>>, vector<8x128xf32>
      tpu.vector_store %arg6[%c0_20, %c0_21], %23 {strides = array<i32>} : memref<8x128xf32, #tpu.memory_space<vmem>>, vector<8x128xf32>,
    } else {
    }
    %c0_6 = arith.constant 0 : index
    %c0_7 = arith.constant 0 : index
    %8 = vector.load %arg5[%c0_6, %c0_7] : memref<8x128xf32, #tpu.memory_space<vmem>>, vector<8x128xf32>
    %cst_8 = arith.constant dense<0.000000e+00> : vector<128xf32>
    %9 = vector.multi_reduction <add>, %2, %cst_8 [0] : vector<128x128xf32> to vector<128xf32>
    %10 = vector.shape_cast %9 : vector<128xf32> to vector<1x128xf32>
    %11 = vector.broadcast %10 : vector<1x128xf32> to vector<8x128xf32>
    %12 = arith.addf %8, %11 : vector<8x128xf32>
    %c0_9 = arith.constant 0 : index
    %c0_10 = arith.constant 0 : index
    %13 = vector.load %arg5[%c0_9, %c0_10] : memref<8x128xf32, #tpu.memory_space<vmem>>, vector<8x128xf32>
    tpu.vector_store %arg5[%c0_9, %c0_10], %12 {strides = array<i32>} : memref<8x128xf32, #tpu.memory_space<vmem>>, vector<8x128xf32>,
    %c0_11 = arith.constant 0 : index
    %c0_12 = arith.constant 0 : index
    %14 = vector.load %arg6[%c0_11, %c0_12] : memref<8x128xf32, #tpu.memory_space<vmem>>, vector<8x128xf32>
    %15 = arith.mulf %2, %2 : vector<128x128xf32>
    %cst_13 = arith.constant dense<0.000000e+00> : vector<128xf32>
    %16 = vector.multi_reduction <add>, %15, %cst_13 [0] : vector<128x128xf32> to vector<128xf32>
    %17 = vector.shape_cast %16 : vector<128xf32> to vector<1x128xf32>
    %18 = vector.broadcast %17 : vector<1x128xf32> to vector<8x128xf32>
    %19 = arith.addf %14, %18 : vector<8x128xf32>
    %c0_14 = arith.constant 0 : index
    %c0_15 = arith.constant 0 : index
    %20 = vector.load %arg6[%c0_14, %c0_15] : memref<8x128xf32, #tpu.memory_space<vmem>>, vector<8x128xf32>
    tpu.vector_store %arg6[%c0_14, %c0_15], %19 {strides = array<i32>} : memref<8x128xf32, #tpu.memory_space<vmem>>, vector<8x128xf32>,
    return
  }
  func.func @transform_0(%arg0: i32, %arg1: i32) -> (i32, i32) {
    %c1_i32 = arith.constant 1 : i32
    %0 = arith.muli %arg0, %c1_i32 : i32
    %1 = arith.addi %0, %arg1 : i32
    %c0_i32 = arith.constant 0 : i32
    %c0_i32_0 = arith.constant 0 : i32
    return %1, %c0_i32 : i32, i32
  }
  func.func @transform_1(%arg0: i32, %arg1: i32) -> (i32, i32) {
    %c0_i32 = arith.constant 0 : i32
    %c0_i32_0 = arith.constant 0 : i32
    %c0_i32_1 = arith.constant 0 : i32
    return %c0_i32, %c0_i32_0 : i32, i32
  }
  func.func @transform_2(%arg0: i32, %arg1: i32) -> (i32, i32) {
    %c1_i32 = arith.constant 1 : i32
    %0 = arith.muli %arg0, %c1_i32 : i32
    %1 = arith.addi %0, %arg1 : i32
    %c0_i32 = arith.constant 0 : i32
    %c0_i32_0 = arith.constant 0 : i32
    return %1, %c0_i32 : i32, i32
  }
  func.func @transform_3(%arg0: i32, %arg1: i32) -> (i32, i32) {
    %c0_i32 = arith.constant 0 : i32
    %c0_i32_0 = arith.constant 0 : i32
    return %arg0, %c0_i32 : i32, i32
  }
  func.func @transform_4(%arg0: i32, %arg1: i32) -> (i32, i32) {
    %c0_i32 = arith.constant 0 : i32
    %c0_i32_0 = arith.constant 0 : i32
    return %arg0, %c0_i32 : i32, i32
  }
}

module attributes {stable_mosaic.version = 11 : i64} {
  func.func @_bn_act_kernel(%arg0: i32, %arg1: memref<128x128xbf16, #tpu.memory_space<vmem>>, %arg2: memref<1x128xf32, #tpu.memory_space<vmem>>, %arg3: memref<1x128xf32, #tpu.memory_space<vmem>>, %arg4: memref<128x128xbf16, #tpu.memory_space<vmem>>) attributes {dimension_semantics = [#tpu.dimension_semantics<parallel>], iteration_bounds = array<i64: 1>, scalar_prefetch = 0 : i64, scratch_operands = 0 : i64, tpu.core_type = #tpu.core_type<tc>, window_params = [{transform_indices = @transform_0, window_bounds = array<i64: 128, 128>}, {pipeline_mode = #tpu.pipeline_mode<synchronous>, transform_indices = @transform_1, window_bounds = array<i64: 1, 128>}, {pipeline_mode = #tpu.pipeline_mode<synchronous>, transform_indices = @transform_2, window_bounds = array<i64: 1, 128>}, {transform_indices = @transform_3, window_bounds = array<i64: 128, 128>}]} {
    %c0 = arith.constant 0 : index
    %c0_0 = arith.constant 0 : index
    %0 = vector.load %arg1[%c0, %c0_0] : memref<128x128xbf16, #tpu.memory_space<vmem>>, vector<128x128xbf16>
    %1 = arith.extf %0 : vector<128x128xbf16> to vector<128x128xf32>
    %c0_1 = arith.constant 0 : index
    %c0_2 = arith.constant 0 : index
    %2 = vector.load %arg2[%c0_1, %c0_2] : memref<1x128xf32, #tpu.memory_space<vmem>>, vector<1x128xf32>
    %3 = vector.broadcast %2 : vector<1x128xf32> to vector<128x128xf32>
    %4 = arith.mulf %1, %3 : vector<128x128xf32>
    %c0_3 = arith.constant 0 : index
    %c0_4 = arith.constant 0 : index
    %5 = vector.load %arg3[%c0_3, %c0_4] : memref<1x128xf32, #tpu.memory_space<vmem>>, vector<1x128xf32>
    %6 = vector.broadcast %5 : vector<1x128xf32> to vector<128x128xf32>
    %7 = arith.addf %4, %6 : vector<128x128xf32>
    %cst = arith.constant 0.000000e+00 : f32
    %8 = vector.broadcast %cst : f32 to vector<128x128xf32>
    %9 = arith.maximumf %7, %8 : vector<128x128xf32>
    %10 = arith.truncf %9 : vector<128x128xf32> to vector<128x128xbf16>
    %c0_5 = arith.constant 0 : index
    %c0_6 = arith.constant 0 : index
    %11 = vector.load %arg4[%c0_5, %c0_6] : memref<128x128xbf16, #tpu.memory_space<vmem>>, vector<128x128xbf16>
    tpu.vector_store %arg4[%c0_5, %c0_6], %10 {strides = array<i32>} : memref<128x128xbf16, #tpu.memory_space<vmem>>, vector<128x128xbf16>,
    return
  }
  func.func @transform_0(%arg0: i32) -> (i32, i32) {
    %c0_i32 = arith.constant 0 : i32
    %c0_i32_0 = arith.constant 0 : i32
    return %arg0, %c0_i32 : i32, i32
  }
  func.func @transform_1(%arg0: i32) -> (i32, i32) {
    %c0_i32 = arith.constant 0 : i32
    %c0_i32_0 = arith.constant 0 : i32
    %c0_i32_1 = arith.constant 0 : i32
    return %c0_i32, %c0_i32_0 : i32, i32
  }
  func.func @transform_2(%arg0: i32) -> (i32, i32) {
    %c0_i32 = arith.constant 0 : i32
    %c0_i32_0 = arith.constant 0 : i32
    %c0_i32_1 = arith.constant 0 : i32
    return %c0_i32, %c0_i32_0 : i32, i32
  }
  func.func @transform_3(%arg0: i32) -> (i32, i32) {
    %c0_i32 = arith.constant 0 : i32
    %c0_i32_0 = arith.constant 0 : i32
    return %arg0, %c0_i32 : i32, i32
  }
}

module attributes {stable_mosaic.version = 11 : i64} {
  func.func @_matmul_stats_kernel(%arg0: i32, %arg1: i32, %arg2: memref<128x72xbf16, #tpu.memory_space<vmem>>, %arg3: memref<72x128xbf16, #tpu.memory_space<vmem>>, %arg4: memref<128x128xbf16, #tpu.memory_space<vmem>>, %arg5: memref<8x128xf32, #tpu.memory_space<vmem>>, %arg6: memref<8x128xf32, #tpu.memory_space<vmem>>) attributes {dimension_semantics = [#tpu.dimension_semantics<parallel>, #tpu.dimension_semantics<arbitrary>], iteration_bounds = array<i64: 1, 1>, scalar_prefetch = 0 : i64, scratch_operands = 0 : i64, tpu.core_type = #tpu.core_type<tc>, window_params = [{transform_indices = @transform_0, window_bounds = array<i64: 128, 72>}, {pipeline_mode = #tpu.pipeline_mode<synchronous>, transform_indices = @transform_1, window_bounds = array<i64: 72, 128>}, {transform_indices = @transform_2, window_bounds = array<i64: 128, 128>}, {transform_indices = @transform_3, window_bounds = array<i64: 8, 128>}, {transform_indices = @transform_4, window_bounds = array<i64: 8, 128>}]} {
    %c0 = arith.constant 0 : index
    %c0_0 = arith.constant 0 : index
    %0 = vector.load %arg2[%c0, %c0_0] : memref<128x72xbf16, #tpu.memory_space<vmem>>, vector<128x72xbf16>
    %c0_1 = arith.constant 0 : index
    %c0_2 = arith.constant 0 : index
    %1 = vector.load %arg3[%c0_1, %c0_2] : memref<72x128xbf16, #tpu.memory_space<vmem>>, vector<72x128xbf16>
    %cst = arith.constant dense<0.000000e+00> : vector<128x128xf32>
    %2 = tpu.matmul %0, %1, %cst {dimension_numbers = #tpu.dot_dimension_numbers<[1], [0], [0], [1], [0, 0, 1, 1], [], []>} : vector<128x72xbf16>, vector<72x128xbf16>, vector<128x128xf32> -> vector<128x128xf32>
    %3 = arith.truncf %2 : vector<128x128xf32> to vector<128x128xbf16>
    %c0_3 = arith.constant 0 : index
    %c0_4 = arith.constant 0 : index
    %4 = vector.load %arg4[%c0_3, %c0_4] : memref<128x128xbf16, #tpu.memory_space<vmem>>, vector<128x128xbf16>
    tpu.vector_store %arg4[%c0_3, %c0_4], %3 {strides = array<i32>} : memref<128x128xbf16, #tpu.memory_space<vmem>>, vector<128x128xbf16>,
    %c0_i32 = arith.constant 0 : i32
    %5 = arith.cmpi eq, %arg1, %c0_i32 : i32
    %6 = arith.extui %5 : i1 to i32
    %c0_i32_5 = arith.constant 0 : i32
    %7 = arith.cmpi ne, %6, %c0_i32_5 : i32
    scf.if %7 {
      %cst_16 = arith.constant 0.000000e+00 : f32
      %21 = vector.broadcast %cst_16 : f32 to vector<8x128xf32>
      %c0_17 = arith.constant 0 : index
      %c0_18 = arith.constant 0 : index
      %22 = vector.load %arg5[%c0_17, %c0_18] : memref<8x128xf32, #tpu.memory_space<vmem>>, vector<8x128xf32>
      tpu.vector_store %arg5[%c0_17, %c0_18], %21 {strides = array<i32>} : memref<8x128xf32, #tpu.memory_space<vmem>>, vector<8x128xf32>,
      %cst_19 = arith.constant 0.000000e+00 : f32
      %23 = vector.broadcast %cst_19 : f32 to vector<8x128xf32>
      %c0_20 = arith.constant 0 : index
      %c0_21 = arith.constant 0 : index
      %24 = vector.load %arg6[%c0_20, %c0_21] : memref<8x128xf32, #tpu.memory_space<vmem>>, vector<8x128xf32>
      tpu.vector_store %arg6[%c0_20, %c0_21], %23 {strides = array<i32>} : memref<8x128xf32, #tpu.memory_space<vmem>>, vector<8x128xf32>,
    } else {
    }
    %c0_6 = arith.constant 0 : index
    %c0_7 = arith.constant 0 : index
    %8 = vector.load %arg5[%c0_6, %c0_7] : memref<8x128xf32, #tpu.memory_space<vmem>>, vector<8x128xf32>
    %cst_8 = arith.constant dense<0.000000e+00> : vector<128xf32>
    %9 = vector.multi_reduction <add>, %2, %cst_8 [0] : vector<128x128xf32> to vector<128xf32>
    %10 = vector.shape_cast %9 : vector<128xf32> to vector<1x128xf32>
    %11 = vector.broadcast %10 : vector<1x128xf32> to vector<8x128xf32>
    %12 = arith.addf %8, %11 : vector<8x128xf32>
    %c0_9 = arith.constant 0 : index
    %c0_10 = arith.constant 0 : index
    %13 = vector.load %arg5[%c0_9, %c0_10] : memref<8x128xf32, #tpu.memory_space<vmem>>, vector<8x128xf32>
    tpu.vector_store %arg5[%c0_9, %c0_10], %12 {strides = array<i32>} : memref<8x128xf32, #tpu.memory_space<vmem>>, vector<8x128xf32>,
    %c0_11 = arith.constant 0 : index
    %c0_12 = arith.constant 0 : index
    %14 = vector.load %arg6[%c0_11, %c0_12] : memref<8x128xf32, #tpu.memory_space<vmem>>, vector<8x128xf32>
    %15 = arith.mulf %2, %2 : vector<128x128xf32>
    %cst_13 = arith.constant dense<0.000000e+00> : vector<128xf32>
    %16 = vector.multi_reduction <add>, %15, %cst_13 [0] : vector<128x128xf32> to vector<128xf32>
    %17 = vector.shape_cast %16 : vector<128xf32> to vector<1x128xf32>
    %18 = vector.broadcast %17 : vector<1x128xf32> to vector<8x128xf32>
    %19 = arith.addf %14, %18 : vector<8x128xf32>
    %c0_14 = arith.constant 0 : index
    %c0_15 = arith.constant 0 : index
    %20 = vector.load %arg6[%c0_14, %c0_15] : memref<8x128xf32, #tpu.memory_space<vmem>>, vector<8x128xf32>
    tpu.vector_store %arg6[%c0_14, %c0_15], %19 {strides = array<i32>} : memref<8x128xf32, #tpu.memory_space<vmem>>, vector<8x128xf32>,
    return
  }
  func.func @transform_0(%arg0: i32, %arg1: i32) -> (i32, i32) {
    %c1_i32 = arith.constant 1 : i32
    %0 = arith.muli %arg0, %c1_i32 : i32
    %1 = arith.addi %0, %arg1 : i32
    %c0_i32 = arith.constant 0 : i32
    %c0_i32_0 = arith.constant 0 : i32
    return %1, %c0_i32 : i32, i32
  }
  func.func @transform_1(%arg0: i32, %arg1: i32) -> (i32, i32) {
    %c0_i32 = arith.constant 0 : i32
    %c0_i32_0 = arith.constant 0 : i32
    %c0_i32_1 = arith.constant 0 : i32
    return %c0_i32, %c0_i32_0 : i32, i32
  }
  func.func @transform_2(%arg0: i32, %arg1: i32) -> (i32, i32) {
    %c1_i32 = arith.constant 1 : i32
    %0 = arith.muli %arg0, %c1_i32 : i32
    %1 = arith.addi %0, %arg1 : i32
    %c0_i32 = arith.constant 0 : i32
    %c0_i32_0 = arith.constant 0 : i32
    return %1, %c0_i32 : i32, i32
  }
  func.func @transform_3(%arg0: i32, %arg1: i32) -> (i32, i32) {
    %c0_i32 = arith.constant 0 : i32
    %c0_i32_0 = arith.constant 0 : i32
    return %arg0, %c0_i32 : i32, i32
  }
  func.func @transform_4(%arg0: i32, %arg1: i32) -> (i32, i32) {
    %c0_i32 = arith.constant 0 : i32
    %c0_i32_0 = arith.constant 0 : i32
    return %arg0, %c0_i32 : i32, i32
  }
}

module attributes {stable_mosaic.version = 11 : i64} {
  func.func @_matmul_stats_kernel(%arg0: i32, %arg1: i32, %arg2: memref<128x4xbf16, #tpu.memory_space<vmem>>, %arg3: memref<4x128xbf16, #tpu.memory_space<vmem>>, %arg4: memref<128x128xbf16, #tpu.memory_space<vmem>>, %arg5: memref<8x128xf32, #tpu.memory_space<vmem>>, %arg6: memref<8x128xf32, #tpu.memory_space<vmem>>) attributes {dimension_semantics = [#tpu.dimension_semantics<parallel>, #tpu.dimension_semantics<arbitrary>], iteration_bounds = array<i64: 1, 1>, scalar_prefetch = 0 : i64, scratch_operands = 0 : i64, tpu.core_type = #tpu.core_type<tc>, window_params = [{transform_indices = @transform_0, window_bounds = array<i64: 128, 4>}, {pipeline_mode = #tpu.pipeline_mode<synchronous>, transform_indices = @transform_1, window_bounds = array<i64: 4, 128>}, {transform_indices = @transform_2, window_bounds = array<i64: 128, 128>}, {transform_indices = @transform_3, window_bounds = array<i64: 8, 128>}, {transform_indices = @transform_4, window_bounds = array<i64: 8, 128>}]} {
    %c0 = arith.constant 0 : index
    %c0_0 = arith.constant 0 : index
    %0 = vector.load %arg2[%c0, %c0_0] : memref<128x4xbf16, #tpu.memory_space<vmem>>, vector<128x4xbf16>
    %c0_1 = arith.constant 0 : index
    %c0_2 = arith.constant 0 : index
    %1 = vector.load %arg3[%c0_1, %c0_2] : memref<4x128xbf16, #tpu.memory_space<vmem>>, vector<4x128xbf16>
    %cst = arith.constant dense<0.000000e+00> : vector<128x128xf32>
    %2 = tpu.matmul %0, %1, %cst {dimension_numbers = #tpu.dot_dimension_numbers<[1], [0], [0], [1], [0, 0, 1, 1], [], []>} : vector<128x4xbf16>, vector<4x128xbf16>, vector<128x128xf32> -> vector<128x128xf32>
    %3 = arith.truncf %2 : vector<128x128xf32> to vector<128x128xbf16>
    %c0_3 = arith.constant 0 : index
    %c0_4 = arith.constant 0 : index
    %4 = vector.load %arg4[%c0_3, %c0_4] : memref<128x128xbf16, #tpu.memory_space<vmem>>, vector<128x128xbf16>
    tpu.vector_store %arg4[%c0_3, %c0_4], %3 {strides = array<i32>} : memref<128x128xbf16, #tpu.memory_space<vmem>>, vector<128x128xbf16>,
    %c0_i32 = arith.constant 0 : i32
    %5 = arith.cmpi eq, %arg1, %c0_i32 : i32
    %6 = arith.extui %5 : i1 to i32
    %c0_i32_5 = arith.constant 0 : i32
    %7 = arith.cmpi ne, %6, %c0_i32_5 : i32
    scf.if %7 {
      %cst_16 = arith.constant 0.000000e+00 : f32
      %21 = vector.broadcast %cst_16 : f32 to vector<8x128xf32>
      %c0_17 = arith.constant 0 : index
      %c0_18 = arith.constant 0 : index
      %22 = vector.load %arg5[%c0_17, %c0_18] : memref<8x128xf32, #tpu.memory_space<vmem>>, vector<8x128xf32>
      tpu.vector_store %arg5[%c0_17, %c0_18], %21 {strides = array<i32>} : memref<8x128xf32, #tpu.memory_space<vmem>>, vector<8x128xf32>,
      %cst_19 = arith.constant 0.000000e+00 : f32
      %23 = vector.broadcast %cst_19 : f32 to vector<8x128xf32>
      %c0_20 = arith.constant 0 : index
      %c0_21 = arith.constant 0 : index
      %24 = vector.load %arg6[%c0_20, %c0_21] : memref<8x128xf32, #tpu.memory_space<vmem>>, vector<8x128xf32>
      tpu.vector_store %arg6[%c0_20, %c0_21], %23 {strides = array<i32>} : memref<8x128xf32, #tpu.memory_space<vmem>>, vector<8x128xf32>,
    } else {
    }
    %c0_6 = arith.constant 0 : index
    %c0_7 = arith.constant 0 : index
    %8 = vector.load %arg5[%c0_6, %c0_7] : memref<8x128xf32, #tpu.memory_space<vmem>>, vector<8x128xf32>
    %cst_8 = arith.constant dense<0.000000e+00> : vector<128xf32>
    %9 = vector.multi_reduction <add>, %2, %cst_8 [0] : vector<128x128xf32> to vector<128xf32>
    %10 = vector.shape_cast %9 : vector<128xf32> to vector<1x128xf32>
    %11 = vector.broadcast %10 : vector<1x128xf32> to vector<8x128xf32>
    %12 = arith.addf %8, %11 : vector<8x128xf32>
    %c0_9 = arith.constant 0 : index
    %c0_10 = arith.constant 0 : index
    %13 = vector.load %arg5[%c0_9, %c0_10] : memref<8x128xf32, #tpu.memory_space<vmem>>, vector<8x128xf32>
    tpu.vector_store %arg5[%c0_9, %c0_10], %12 {strides = array<i32>} : memref<8x128xf32, #tpu.memory_space<vmem>>, vector<8x128xf32>,
    %c0_11 = arith.constant 0 : index
    %c0_12 = arith.constant 0 : index
    %14 = vector.load %arg6[%c0_11, %c0_12] : memref<8x128xf32, #tpu.memory_space<vmem>>, vector<8x128xf32>
    %15 = arith.mulf %2, %2 : vector<128x128xf32>
    %cst_13 = arith.constant dense<0.000000e+00> : vector<128xf32>
    %16 = vector.multi_reduction <add>, %15, %cst_13 [0] : vector<128x128xf32> to vector<128xf32>
    %17 = vector.shape_cast %16 : vector<128xf32> to vector<1x128xf32>
    %18 = vector.broadcast %17 : vector<1x128xf32> to vector<8x128xf32>
    %19 = arith.addf %14, %18 : vector<8x128xf32>
    %c0_14 = arith.constant 0 : index
    %c0_15 = arith.constant 0 : index
    %20 = vector.load %arg6[%c0_14, %c0_15] : memref<8x128xf32, #tpu.memory_space<vmem>>, vector<8x128xf32>
    tpu.vector_store %arg6[%c0_14, %c0_15], %19 {strides = array<i32>} : memref<8x128xf32, #tpu.memory_space<vmem>>, vector<8x128xf32>,
    return
  }
  func.func @transform_0(%arg0: i32, %arg1: i32) -> (i32, i32) {
    %c1_i32 = arith.constant 1 : i32
    %0 = arith.muli %arg0, %c1_i32 : i32
    %1 = arith.addi %0, %arg1 : i32
    %c0_i32 = arith.constant 0 : i32
    %c0_i32_0 = arith.constant 0 : i32
    return %1, %c0_i32 : i32, i32
  }
  func.func @transform_1(%arg0: i32, %arg1: i32) -> (i32, i32) {
    %c0_i32 = arith.constant 0 : i32
    %c0_i32_0 = arith.constant 0 : i32
    %c0_i32_1 = arith.constant 0 : i32
    return %c0_i32, %c0_i32_0 : i32, i32
  }
  func.func @transform_2(%arg0: i32, %arg1: i32) -> (i32, i32) {
    %c1_i32 = arith.constant 1 : i32
    %0 = arith.muli %arg0, %c1_i32 : i32
    %1 = arith.addi %0, %arg1 : i32
    %c0_i32 = arith.constant 0 : i32
    %c0_i32_0 = arith.constant 0 : i32
    return %1, %c0_i32 : i32, i32
  }
  func.func @transform_3(%arg0: i32, %arg1: i32) -> (i32, i32) {
    %c0_i32 = arith.constant 0 : i32
    %c0_i32_0 = arith.constant 0 : i32
    return %arg0, %c0_i32 : i32, i32
  }
  func.func @transform_4(%arg0: i32, %arg1: i32) -> (i32, i32) {
    %c0_i32 = arith.constant 0 : i32
    %c0_i32_0 = arith.constant 0 : i32
    return %arg0, %c0_i32 : i32, i32
  }
}

module attributes {stable_mosaic.version = 11 : i64} {
  func.func @_bn_act_kernel(%arg0: i32, %arg1: memref<128x128xbf16, #tpu.memory_space<vmem>>, %arg2: memref<1x128xf32, #tpu.memory_space<vmem>>, %arg3: memref<1x128xf32, #tpu.memory_space<vmem>>, %arg4: memref<128x128xbf16, #tpu.memory_space<vmem>>, %arg5: memref<1x128xf32, #tpu.memory_space<vmem>>, %arg6: memref<1x128xf32, #tpu.memory_space<vmem>>, %arg7: memref<128x128xf32, #tpu.memory_space<vmem>>) attributes {dimension_semantics = [#tpu.dimension_semantics<parallel>], iteration_bounds = array<i64: 1>, scalar_prefetch = 0 : i64, scratch_operands = 0 : i64, tpu.core_type = #tpu.core_type<tc>, window_params = [{transform_indices = @transform_0, window_bounds = array<i64: 128, 128>}, {pipeline_mode = #tpu.pipeline_mode<synchronous>, transform_indices = @transform_1, window_bounds = array<i64: 1, 128>}, {pipeline_mode = #tpu.pipeline_mode<synchronous>, transform_indices = @transform_2, window_bounds = array<i64: 1, 128>}, {transform_indices = @transform_3, window_bounds = array<i64: 128, 128>}, {pipeline_mode = #tpu.pipeline_mode<synchronous>, transform_indices = @transform_4, window_bounds = array<i64: 1, 128>}, {pipeline_mode = #tpu.pipeline_mode<synchronous>, transform_indices = @transform_5, window_bounds = array<i64: 1, 128>}, {transform_indices = @transform_6, window_bounds = array<i64: 128, 128>}]} {
    %c0 = arith.constant 0 : index
    %c0_0 = arith.constant 0 : index
    %0 = vector.load %arg1[%c0, %c0_0] : memref<128x128xbf16, #tpu.memory_space<vmem>>, vector<128x128xbf16>
    %1 = arith.extf %0 : vector<128x128xbf16> to vector<128x128xf32>
    %c0_1 = arith.constant 0 : index
    %c0_2 = arith.constant 0 : index
    %2 = vector.load %arg2[%c0_1, %c0_2] : memref<1x128xf32, #tpu.memory_space<vmem>>, vector<1x128xf32>
    %3 = vector.broadcast %2 : vector<1x128xf32> to vector<128x128xf32>
    %4 = arith.mulf %1, %3 : vector<128x128xf32>
    %c0_3 = arith.constant 0 : index
    %c0_4 = arith.constant 0 : index
    %5 = vector.load %arg3[%c0_3, %c0_4] : memref<1x128xf32, #tpu.memory_space<vmem>>, vector<1x128xf32>
    %6 = vector.broadcast %5 : vector<1x128xf32> to vector<128x128xf32>
    %7 = arith.addf %4, %6 : vector<128x128xf32>
    %c0_5 = arith.constant 0 : index
    %c0_6 = arith.constant 0 : index
    %8 = vector.load %arg4[%c0_5, %c0_6] : memref<128x128xbf16, #tpu.memory_space<vmem>>, vector<128x128xbf16>
    %9 = arith.extf %8 : vector<128x128xbf16> to vector<128x128xf32>
    %c0_7 = arith.constant 0 : index
    %c0_8 = arith.constant 0 : index
    %10 = vector.load %arg5[%c0_7, %c0_8] : memref<1x128xf32, #tpu.memory_space<vmem>>, vector<1x128xf32>
    %11 = vector.broadcast %10 : vector<1x128xf32> to vector<128x128xf32>
    %12 = arith.mulf %9, %11 : vector<128x128xf32>
    %c0_9 = arith.constant 0 : index
    %c0_10 = arith.constant 0 : index
    %13 = vector.load %arg6[%c0_9, %c0_10] : memref<1x128xf32, #tpu.memory_space<vmem>>, vector<1x128xf32>
    %14 = vector.broadcast %13 : vector<1x128xf32> to vector<128x128xf32>
    %15 = arith.addf %12, %14 : vector<128x128xf32>
    %16 = arith.addf %7, %15 : vector<128x128xf32>
    %cst = arith.constant 0.000000e+00 : f32
    %17 = vector.broadcast %cst : f32 to vector<128x128xf32>
    %18 = arith.maximumf %16, %17 : vector<128x128xf32>
    %c0_11 = arith.constant 0 : index
    %c0_12 = arith.constant 0 : index
    %19 = vector.load %arg7[%c0_11, %c0_12] : memref<128x128xf32, #tpu.memory_space<vmem>>, vector<128x128xf32>
    tpu.vector_store %arg7[%c0_11, %c0_12], %18 {strides = array<i32>} : memref<128x128xf32, #tpu.memory_space<vmem>>, vector<128x128xf32>,
    return
  }
  func.func @transform_0(%arg0: i32) -> (i32, i32) {
    %c0_i32 = arith.constant 0 : i32
    %c0_i32_0 = arith.constant 0 : i32
    return %arg0, %c0_i32 : i32, i32
  }
  func.func @transform_1(%arg0: i32) -> (i32, i32) {
    %c0_i32 = arith.constant 0 : i32
    %c0_i32_0 = arith.constant 0 : i32
    %c0_i32_1 = arith.constant 0 : i32
    return %c0_i32, %c0_i32_0 : i32, i32
  }
  func.func @transform_2(%arg0: i32) -> (i32, i32) {
    %c0_i32 = arith.constant 0 : i32
    %c0_i32_0 = arith.constant 0 : i32
    %c0_i32_1 = arith.constant 0 : i32
    return %c0_i32, %c0_i32_0 : i32, i32
  }
  func.func @transform_3(%arg0: i32) -> (i32, i32) {
    %c0_i32 = arith.constant 0 : i32
    %c0_i32_0 = arith.constant 0 : i32
    return %arg0, %c0_i32 : i32, i32
  }
  func.func @transform_4(%arg0: i32) -> (i32, i32) {
    %c0_i32 = arith.constant 0 : i32
    %c0_i32_0 = arith.constant 0 : i32
    %c0_i32_1 = arith.constant 0 : i32
    return %c0_i32, %c0_i32_0 : i32, i32
  }
  func.func @transform_5(%arg0: i32) -> (i32, i32) {
    %c0_i32 = arith.constant 0 : i32
    %c0_i32_0 = arith.constant 0 : i32
    %c0_i32_1 = arith.constant 0 : i32
    return %c0_i32, %c0_i32_0 : i32, i32
  }
  func.func @transform_6(%arg0: i32) -> (i32, i32) {
    %c0_i32 = arith.constant 0 : i32
    %c0_i32_0 = arith.constant 0 : i32
    return %arg0, %c0_i32 : i32, i32
  }
}

</mosaic_0001>

<llo_original>
// kernel: basic_block_forward.6
$region0: #{basic_block_forward.6}
  #allocation0 [shape = 'u32[]', space=smem, size = 0x4, offset = 0x4, fixed_abs, tag = 'smem constant byte address 0x4 - core index']
  #allocation1 [shape = 'u32[144,128]{1,0:T(1,128)}', space=vmem, size = 0x12000, scoped, tag = 'internal scratch']
  %s0 = inlined_call_operand.vmem [shape: bf16[128,128], index: 0, kind: input, shape index: {}]
  %s1 = inlined_call_operand.vmem [shape: f32[1,128], index: 1, kind: input, shape index: {}]
  %s2 = inlined_call_operand.vmem [shape: f32[1,128], index: 2, kind: input, shape index: {}]
  %s3 = inlined_call_operand.vmem [shape: bf16[128,128], index: 3, kind: output, shape index: {}]
  %s4 = sld [smem:[#allocation0]]
  $region22: #{basic_block_forward.6} parent=0
    _
  %s6 = ssub.s32 1, %s4
  %s7 = scalar_select 0, %s6, %s4
  // Predicated region
  $region2: #{basic_block_forward.6} parent=0 // pred_check
    _
  $region3: #{basic_block_forward.6} parent=0 // pred_check_branch
    %9 = sbr.rel (0) target = $region5
  $region4: #{basic_block_forward.6} parent=0 // pred_region
    _
  $region5: #{basic_block_forward.6} parent=0 // pred_fallthru
    _
  // Predicated region
  $region6: #{basic_block_forward.6} parent=0 // pred_check
    _
  $region7: #{basic_block_forward.6} parent=0 // pred_check_branch
    %11 = sbr.rel (0) target = $region9
  $region8: #{basic_block_forward.6} parent=0 // pred_region
    _
  $region9: #{basic_block_forward.6} parent=0 // pred_fallthru
    _
  // Predicated region
  $region10: #{basic_block_forward.6} parent=0 // pred_check
    _
  $region11: #{basic_block_forward.6} parent=0 // pred_check_branch
    %13 = sbr.rel (0) target = $region13
  $region12: #{basic_block_forward.6} parent=0 // pred_region
    _
  $region13: #{basic_block_forward.6} parent=0 // pred_fallthru
    _
  %v14 = vld [vmem:[%s0] sm:$0xf]
  %v15 = vld [vmem:[%s0 + $0x4] sm:$0xf]
  %v16 = vld [vmem:[%s0 + $0x8] sm:$0xf]
  %v17 = vld [vmem:[%s0 + $0xc] sm:$0xf]
  %v18 = vld [vmem:[%s0 + $0x10] sm:$0xf]
  %v19 = vld [vmem:[%s0 + $0x14] sm:$0xf]
  %v20 = vld [vmem:[%s0 + $0x18] sm:$0xf]
  %v21 = vld [vmem:[%s0 + $0x1c] sm:$0xf]
  %v22 = vld [vmem:[%s0 + $0x20] sm:$0xf]
  %v23 = vld [vmem:[%s0 + $0x24] sm:$0xf]
  %v24 = vld [vmem:[%s0 + $0x28] sm:$0xf]
  %v25 = vld [vmem:[%s0 + $0x2c] sm:$0xf]
  %v26 = vld [vmem:[%s0 + $0x30] sm:$0xf]
  %v27 = vld [vmem:[%s0 + $0x34] sm:$0xf]
  %v28 = vld [vmem:[%s0 + $0x38] sm:$0xf]
  %v29 = vld [vmem:[%s0 + $0x3c] sm:$0xf]
  %v30 = vunpack.c.l.bf16 %v14
  %v31 = vunpack.c.l.bf16 %v15
  %v32 = vunpack.c.l.bf16 %v16
  %v33 = vunpack.c.l.bf16 %v17
  %v34 = vunpack.c.l.bf16 %v18
  %v35 = vunpack.c.l.bf16 %v19
  %v36 = vunpack.c.l.bf16 %v20
  %v37 = vunpack.c.l.bf16 %v21
  %v38 = vunpack.c.l.bf16 %v22
  %v39 = vunpack.c.l.bf16 %v23
  %v40 = vunpack.c.l.bf16 %v24
  %v41 = vunpack.c.l.bf16 %v25
  %v42 = vunpack.c.l.bf16 %v26
  %v43 = vunpack.c.l.bf16 %v27
  %v44 = vunpack.c.l.bf16 %v28
  %v45 = vunpack.c.l.bf16 %v29
  %v46 = vld [vmem:[%s1] sm:$0x1]
  %v48 = vlaneseq
  %v49 = vshrl.u32 %v48, 7
  %v50 = vsub.s32 0, %v49
  %v51 = vrot.slane %v46, %v50
  %v53 = vmul.f32 %v30, %v51
  %v54 = vmul.f32 %v31, %v51
  %v55 = vmul.f32 %v32, %v51
  %v56 = vmul.f32 %v33, %v51
  %v57 = vmul.f32 %v34, %v51
  %v58 = vmul.f32 %v35, %v51
  %v59 = vmul.f32 %v36, %v51
  %v60 = vmul.f32 %v37, %v51
  %v61 = vmul.f32 %v38, %v51
  %v62 = vmul.f32 %v39, %v51
  %v63 = vmul.f32 %v40, %v51
  %v64 = vmul.f32 %v41, %v51
  %v65 = vmul.f32 %v42, %v51
  %v66 = vmul.f32 %v43, %v51
  %v67 = vmul.f32 %v44, %v51
  %v68 = vmul.f32 %v45, %v51
  %v69 = vld [vmem:[%s2] sm:$0x1]
  %v71 = vlaneseq
  %v72 = vshrl.u32 %v71, 7
  %v73 = vsub.s32 0, %v72
  %v74 = vrot.slane %v69, %v73
  %v76 = vadd.f32 %v53, %v74
  %v77 = vadd.f32 %v54, %v74
  %v78 = vadd.f32 %v55, %v74
  %v79 = vadd.f32 %v56, %v74
  %v80 = vadd.f32 %v57, %v74
  %v81 = vadd.f32 %v58, %v74
  %v82 = vadd.f32 %v59, %v74
  %v83 = vadd.f32 %v60, %v74
  %v84 = vadd.f32 %v61, %v74
  %v85 = vadd.f32 %v62, %v74
  %v86 = vadd.f32 %v63, %v74
  %v87 = vadd.f32 %v64, %v74
  %v88 = vadd.f32 %v65, %v74
  %v89 = vadd.f32 %v66, %v74
  %v90 = vadd.f32 %v67, %v74
  %v91 = vadd.f32 %v68, %v74
  %v92 = vmax.f32 %v76, 0.0
  %v93 = vmax.f32 %v77, 0.0
  %v94 = vmax.f32 %v78, 0.0
  %v95 = vmax.f32 %v79, 0.0
  %v96 = vmax.f32 %v80, 0.0
  %v97 = vmax.f32 %v81, 0.0
  %v98 = vmax.f32 %v82, 0.0
  %v99 = vmax.f32 %v83, 0.0
  %v100 = vmax.f32 %v84, 0.0
  %v101 = vmax.f32 %v85, 0.0
  %v102 = vmax.f32 %v86, 0.0
  %v103 = vmax.f32 %v87, 0.0
  %v104 = vmax.f32 %v88, 0.0
  %v105 = vmax.f32 %v89, 0.0
  %v106 = vmax.f32 %v90, 0.0
  %v107 = vmax.f32 %v91, 0.0
  %v108 = vpack.c.bf16 %v93, %v92
  %v109 = vpack.c.bf16 %v95, %v94
  %v110 = vpack.c.bf16 %v97, %v96
  %v111 = vpack.c.bf16 %v99, %v98
  %v112 = vpack.c.bf16 %v101, %v100
  %v113 = vpack.c.bf16 %v103, %v102
  %v114 = vpack.c.bf16 %v105, %v104
  %v115 = vpack.c.bf16 %v107, %v106
  %v124 = vunpack.c.l.b16 %v108
  %v125 = vunpack.c.h.b16 %v108
  %v126 = vunpack.c.l.b16 %v109
  %v127 = vunpack.c.h.b16 %v109
  %v128 = vunpack.c.l.b16 %v110
  %v129 = vunpack.c.h.b16 %v110
  %v130 = vunpack.c.l.b16 %v111
  %v131 = vunpack.c.h.b16 %v111
  %v132 = vunpack.c.l.b16 %v112
  %v133 = vunpack.c.h.b16 %v112
  %v134 = vunpack.c.l.b16 %v113
  %v135 = vunpack.c.h.b16 %v113
  %v136 = vunpack.c.l.b16 %v114
  %v137 = vunpack.c.h.b16 %v114
  %v138 = vunpack.c.l.b16 %v115
  %v139 = vunpack.c.h.b16 %v115
  %v140 = vpack.c.b16 %v124, %v124
  %v141 = vpack.c.b16 %v125, %v125
  %v142 = vpack.c.b16 %v126, %v126
  %v143 = vpack.c.b16 %v127, %v127
  %v144 = vpack.c.b16 %v128, %v128
  %v145 = vpack.c.b16 %v129, %v129
  %v146 = vpack.c.b16 %v130, %v130
  %v147 = vpack.c.b16 %v131, %v131
  %v148 = vpack.c.b16 %v132, %v132
  %v149 = vpack.c.b16 %v133, %v133
  %v150 = vpack.c.b16 %v134, %v134
  %v151 = vpack.c.b16 %v135, %v135
  %v152 = vpack.c.b16 %v136, %v136
  %v153 = vpack.c.b16 %v137, %v137
  %v154 = vpack.c.b16 %v138, %v138
  %v155 = vpack.c.b16 %v139, %v139
  %172 = vst [vmem:[%s3] sm:$0xf] %v140
  %173 = vst [vmem:[%s3 + $0x4] sm:$0xf] %v141
  %174 = vst [vmem:[%s3 + $0x8] sm:$0xf] %v142
  %175 = vst [vmem:[%s3 + $0xc] sm:$0xf] %v143
  %176 = vst [vmem:[%s3 + $0x10] sm:$0xf] %v144
  %177 = vst [vmem:[%s3 + $0x14] sm:$0xf] %v145
  %178 = vst [vmem:[%s3 + $0x18] sm:$0xf] %v146
  %179 = vst [vmem:[%s3 + $0x1c] sm:$0xf] %v147
  %180 = vst [vmem:[%s3 + $0x20] sm:$0xf] %v148
  %181 = vst [vmem:[%s3 + $0x24] sm:$0xf] %v149
  %182 = vst [vmem:[%s3 + $0x28] sm:$0xf] %v150
  %183 = vst [vmem:[%s3 + $0x2c] sm:$0xf] %v151
  %184 = vst [vmem:[%s3 + $0x30] sm:$0xf] %v152
  %185 = vst [vmem:[%s3 + $0x34] sm:$0xf] %v153
  %186 = vst [vmem:[%s3 + $0x38] sm:$0xf] %v154
  %187 = vst [vmem:[%s3 + $0x3c] sm:$0xf] %v155
  // Predicated region
  $region14: #{basic_block_forward.6} parent=0 // pred_check
    _
  $region15: #{basic_block_forward.6} parent=0 // pred_check_branch
    %189 = sbr.rel (0) target = $region17
  $region16: #{basic_block_forward.6} parent=0 // pred_region
    _
  $region17: #{basic_block_forward.6} parent=0 // pred_fallthru
    _
  // Predicated region
  $region18: #{basic_block_forward.6} parent=0 // pred_check
    _
  $region19: #{basic_block_forward.6} parent=0 // pred_check_branch
    %191 = sbr.rel (0) target = $region21
  $region20: #{basic_block_forward.6} parent=0 // pred_region
    _
  $region21: #{basic_block_forward.6} parent=0 // pred_fallthru
    _

// kernel: basic_block_forward.5
$region0: #{basic_block_forward.5}
  #allocation0 [shape = 'u32[]', space=smem, size = 0x4, offset = 0x4, fixed_abs, tag = 'smem constant byte address 0x4 - core index']
  #allocation1 [shape = 'u32[144,128]{1,0:T(1,128)}', space=vmem, size = 0x12000, scoped, tag = 'internal scratch']
  %s0 = inlined_call_operand.vmem [shape: bf16[128,36], index: 0, kind: input, shape index: {}]
  %s1 = inlined_call_operand.vmem [shape: bf16[36,128], index: 1, kind: input, shape index: {}]
  %s2 = inlined_call_operand.vmem [shape: bf16[128,128], index: 2, kind: output, shape index: {0}]
  %s3 = inlined_call_operand.vmem [shape: f32[8,128], index: 3, kind: output, shape index: {1}]
  %s4 = inlined_call_operand.vmem [shape: f32[8,128], index: 4, kind: output, shape index: {2}]
  %5 = xla_tuple %s2, %s3, %s4
  %s6 = sld [smem:[#allocation0]]
  $region38: #{basic_block_forward.5} parent=0
    _
  %s8 = ssub.s32 1, %s6
  %s9 = scalar_select 0, %s8, %s6
  // Predicated region
  $region2: #{basic_block_forward.5} parent=0 // pred_check
    _
  $region3: #{basic_block_forward.5} parent=0 // pred_check_branch
    %11 = sbr.rel (0) target = $region5
  $region4: #{basic_block_forward.5} parent=0 // pred_region
    %s12 = sadd.s32 0, 0
    %s13 = smul.u32 16, %s12
    %p14 = scmp.lt.s32.totalorder %s13, 15
    %s15 = scalar_select %p14, %s13, 15
    %s16 = smul.addr %s15, 4
    %s17 = scalar_lea.vmem %s0, %s16
    %s18 = sadd.s32 0, 0
    %s19 = smul.u32 16, %s18
  $region5: #{basic_block_forward.5} parent=0 // pred_fallthru
    _
  // Predicated region
  $region6: #{basic_block_forward.5} parent=0 // pred_check
    _
  $region7: #{basic_block_forward.5} parent=0 // pred_check_branch
    %21 = sbr.rel (0) target = $region9
  $region8: #{basic_block_forward.5} parent=0 // pred_region
    _
  $region9: #{basic_block_forward.5} parent=0 // pred_fallthru
    _
  %s22 = sadd.s32 0, 0
  %s23 = smul.u32 16, %s22
  %p24 = scmp.lt.s32.totalorder %s23, 15
  %s25 = scalar_select %p24, %s23, 15
  %s26 = smul.addr %s25, 4
  %s27 = scalar_lea.vmem %s0, %s26
  %s28 = sadd.s32 0, 0
  %s29 = smul.u32 16, %s28
  %p30 = scmp.lt.s32.totalorder %s29, 15
  %s31 = scalar_select %p30, %s29, 15
  %s32 = smul.addr %s31, 4
  %s33 = scalar_lea.vmem %s2, %s32
  %s34 = sadd.s32 0, 0
  %s35 = smul.u32 16, %s34
  %p36 = scmp.lt.s32.totalorder %s35, 15
  %s37 = scalar_select %p36, %s35, 15
  %s38 = smul.addr %s37, 4
  %s39 = scalar_lea.vmem %s0, %s38
  %s40 = sadd.s32 0, 0
  %s41 = smul.u32 16, %s40
  %s42 = sadd.s32 0, 0
  %s43 = smul.u32 16, %s42
  %p44 = scmp.lt.s32.totalorder %s43, 15
  %s45 = scalar_select %p44, %s43, 15
  %s46 = smul.addr %s45, 4
  %s47 = scalar_lea.vmem %s2, %s46
  %s48 = sadd.s32 0, 0
  %s49 = smul.u32 16, %s48
  %v51 = vld [vmem:[%s39] sm:$0xf]
  %v52 = vld [vmem:[%s39 + $0x4] sm:$0xf]
  %v53 = vld [vmem:[%s39 + $0x8] sm:$0xf]
  %v54 = vld [vmem:[%s39 + $0xc] sm:$0xf]
  %v55 = vld [vmem:[%s39 + $0x10] sm:$0xf]
  %v56 = vld [vmem:[%s39 + $0x14] sm:$0xf]
  %v57 = vld [vmem:[%s39 + $0x18] sm:$0xf]
  %v58 = vld [vmem:[%s39 + $0x1c] sm:$0xf]
  %v59 = vld [vmem:[%s39 + $0x20] sm:$0xf]
  %v60 = vld [vmem:[%s39 + $0x24] sm:$0xf]
  %v61 = vld [vmem:[%s39 + $0x28] sm:$0xf]
  %v62 = vld [vmem:[%s39 + $0x2c] sm:$0xf]
  %v63 = vld [vmem:[%s39 + $0x30] sm:$0xf]
  %v64 = vld [vmem:[%s39 + $0x34] sm:$0xf]
  %v65 = vld [vmem:[%s39 + $0x38] sm:$0xf]
  %v66 = vld [vmem:[%s39 + $0x3c] sm:$0xf]
  %v67 = vld [vmem:[%s1] sm:$0xf]
  %v68 = vld [vmem:[%s1 + $0x4] sm:$0xf]
  %v69 = vld [vmem:[%s1 + $0x8] sm:$0xf]
  %v70 = vld [vmem:[%s1 + $0xc] sm:$0xf]
  %v71 = vld [vmem:[%s1 + $0x10] sm:$0x3]
  %v88 = vunpack.c.l.b16 %v51
  %v89 = vunpack.c.l.b16 %v52
  %v90 = vunpack.c.l.b16 %v53
  %v91 = vunpack.c.l.b16 %v54
  %v92 = vunpack.c.l.b16 %v55
  %v93 = vunpack.c.l.b16 %v56
  %v94 = vunpack.c.l.b16 %v57
  %v95 = vunpack.c.l.b16 %v58
  %v96 = vunpack.c.l.b16 %v59
  %v97 = vunpack.c.l.b16 %v60
  %v98 = vunpack.c.l.b16 %v61
  %v99 = vunpack.c.l.b16 %v62
  %v100 = vunpack.c.l.b16 %v63
  %v101 = vunpack.c.l.b16 %v64
  %v102 = vunpack.c.l.b16 %v65
  %v103 = vunpack.c.l.b16 %v66
  %v104 = vpack.c.b16 %v89, %v88
  %v105 = vpack.c.b16 %v91, %v90
  %v106 = vpack.c.b16 %v93, %v92
  %v107 = vpack.c.b16 %v95, %v94
  %v108 = vpack.c.b16 %v97, %v96
  %v109 = vpack.c.b16 %v99, %v98
  %v110 = vpack.c.b16 %v101, %v100
  %v111 = vpack.c.b16 %v103, %v102
  %v117 = vunpack.c.l.b16 %v67
  %v118 = vunpack.c.l.b16 %v68
  %v119 = vunpack.c.l.b16 %v69
  %v120 = vunpack.c.l.b16 %v70
  %v121 = vunpack.c.l.b16 %v71
  %v122 = vpack.c.b16 %v118, %v117
  %v123 = vpack.c.b16 %v120, %v119
  %v124 = vpack.c.b16 %v121, %v121
  %vm127 = vcmask 293888
  %v129 = vsel %vm127, %v104, 0
  %v132 = vsel %vm127, %v105, 0
  %v135 = vsel %vm127, %v106, 0
  %v138 = vsel %vm127, %v107, 0
  %v141 = vsel %vm127, %v108, 0
  %v144 = vsel %vm127, %v109, 0
  %v147 = vsel %vm127, %v110, 0
  %v150 = vsel %vm127, %v111, 0
  %vm152 = vcmask 1041408
  %v154 = vsel %vm152, %v124, 0
  %156 = vmatprep.subr.bf16.mxu0 0
  %157 = vmatpush1.bf16.msra.mxu0 %v122
  %158 = vmatprep.subr.bf16.mxu0 0
  %159 = vmatpush1.bf16.msra.mxu0 %v123
  %160 = vmatprep.subr.bf16.mxu0 0
  %161 = vmatpush1.bf16.msra.mxu0 %v154
  %162 = vmatprep.subr.bf16.mxu0 0
  %163 = vmatpush1.bf16.msra.mxu0 0
  %164 = vmatprep.subr.bf16.mxu0 0
  %165 = vmatpush1.bf16.msra.mxu0 0
  %166 = vmatprep.subr.bf16.mxu0 0
  %167 = vmatpush1.bf16.msra.mxu0 0
  %168 = vmatprep.subr.bf16.mxu0 0
  %169 = vmatpush1.bf16.msra.mxu0 0
  %170 = vmatprep.subr.bf16.mxu0 0
  %171 = vmatpush1.bf16.msra.mxu0 0
  %172 = vmatprep.subr.bf16.mxu0 0
  %173 = vmatpush1.bf16.msra.mxu0 0
  %174 = vmatprep.subr.bf16.mxu0 0
  %175 = vmatpush1.bf16.msra.mxu0 0
  %176 = vmatprep.subr.bf16.mxu0 0
  %177 = vmatpush1.bf16.msra.mxu0 0
  %178 = vmatprep.subr.bf16.mxu0 0
  %179 = vmatpush1.bf16.msra.mxu0 0
  %180 = vmatprep.subr.bf16.mxu0 0
  %181 = vmatpush1.bf16.msra.mxu0 0
  %182 = vmatprep.subr.bf16.mxu0 0
  %183 = vmatpush1.bf16.msra.mxu0 0
  %184 = vmatprep.subr.bf16.mxu0 0
  %185 = vmatpush1.bf16.msra.mxu0 0
  %186 = vmatprep.subr.bf16.mxu0 0
  %187 = vmatpush1.bf16.msra.mxu0 0
  %188 = vmatprep.mubr.bf16.mxu0 0
  %189 = vmatmul.mubr.bf16.gmra.mrb[0].mxu0 %v129
  %v190 = vpop.f32.mrb[0].mxu0
  %v191 = vadd.f32 0.0, %v190
  %v192 = vpop.f32.mrb[0].mxu0
  %v193 = vpop.f32.mrb[0].mxu0
  %v194 = vadd.f32 0.0, %v193
  %v195 = vpop.f32.mrb[0].mxu0
  %196 = vmatprep.mubr.bf16.mxu0 0
  %197 = vmatmul.mubr.bf16.gmra.mrb[0].mxu0 %v132
  %v198 = vpop.f32.mrb[0].mxu0
  %v199 = vadd.f32 0.0, %v198
  %v200 = vpop.f32.mrb[0].mxu0
  %v201 = vpop.f32.mrb[0].mxu0
  %v202 = vadd.f32 0.0, %v201
  %v203 = vpop.f32.mrb[0].mxu0
  %204 = vmatprep.mubr.bf16.mxu0 0
  %205 = vmatmul.mubr.bf16.gmra.mrb[0].mxu0 %v135
  %v206 = vpop.f32.mrb[0].mxu0
  %v207 = vadd.f32 0.0, %v206
  %v208 = vpop.f32.mrb[0].mxu0
  %v209 = vpop.f32.mrb[0].mxu0
  %v210 = vadd.f32 0.0, %v209
  %v211 = vpop.f32.mrb[0].mxu0
  %212 = vmatprep.mubr.bf16.mxu0 0
  %213 = vmatmul.mubr.bf16.gmra.mrb[0].mxu0 %v138
  %v214 = vpop.f32.mrb[0].mxu0
  %v215 = vadd.f32 0.0, %v214
  %v216 = vpop.f32.mrb[0].mxu0
  %v217 = vpop.f32.mrb[0].mxu0
  %v218 = vadd.f32 0.0, %v217
  %v219 = vpop.f32.mrb[0].mxu0
  %220 = vmatprep.mubr.bf16.mxu0 0
  %221 = vmatmul.mubr.bf16.gmra.mrb[0].mxu0 %v141
  %v222 = vpop.f32.mrb[0].mxu0
  %v223 = vadd.f32 0.0, %v222
  %v224 = vpop.f32.mrb[0].mxu0
  %v225 = vpop.f32.mrb[0].mxu0
  %v226 = vadd.f32 0.0, %v225
  %v227 = vpop.f32.mrb[0].mxu0
  %228 = vmatprep.mubr.bf16.mxu0 0
  %229 = vmatmul.mubr.bf16.gmra.mrb[0].mxu0 %v144
  %v230 = vpop.f32.mrb[0].mxu0
  %v231 = vadd.f32 0.0, %v230
  %v232 = vpop.f32.mrb[0].mxu0
  %v233 = vpop.f32.mrb[0].mxu0
  %v234 = vadd.f32 0.0, %v233
  %v235 = vpop.f32.mrb[0].mxu0
  %236 = vmatprep.mubr.bf16.mxu0 0
  %237 = vmatmul.mubr.bf16.gmra.mrb[0].mxu0 %v147
  %v238 = vpop.f32.mrb[0].mxu0
  %v239 = vadd.f32 0.0, %v238
  %v240 = vpop.f32.mrb[0].mxu0
  %v241 = vpop.f32.mrb[0].mxu0
  %v242 = vadd.f32 0.0, %v241
  %v243 = vpop.f32.mrb[0].mxu0
  %244 = vmatprep.mubr.bf16.mxu0 0
  %245 = vmatmul.mubr.bf16.gmra.mrb[0].mxu0 %v150
  %v246 = vpop.f32.mrb[0].mxu0
  %v247 = vadd.f32 0.0, %v246
  %v248 = vpop.f32.mrb[0].mxu0
  %v249 = vpop.f32.mrb[0].mxu0
  %v250 = vadd.f32 0.0, %v249
  %v251 = vpop.f32.mrb[0].mxu0
  %252 = vdwg.mxu0
  %v253 = vpack.c.bf16 %v194, %v191
  %v254 = vpack.c.bf16 %v202, %v199
  %v255 = vpack.c.bf16 %v210, %v207
  %v256 = vpack.c.bf16 %v218, %v215
  %v257 = vpack.c.bf16 %v226, %v223
  %v258 = vpack.c.bf16 %v234, %v231
  %v259 = vpack.c.bf16 %v242, %v239
  %v260 = vpack.c.bf16 %v250, %v247
  %v269 = vunpack.c.l.b16 %v253
  %v270 = vunpack.c.h.b16 %v253
  %v271 = vunpack.c.l.b16 %v254
  %v272 = vunpack.c.h.b16 %v254
  %v273 = vunpack.c.l.b16 %v255
  %v274 = vunpack.c.h.b16 %v255
  %v275 = vunpack.c.l.b16 %v256
  %v276 = vunpack.c.h.b16 %v256
  %v277 = vunpack.c.l.b16 %v257
  %v278 = vunpack.c.h.b16 %v257
  %v279 = vunpack.c.l.b16 %v258
  %v280 = vunpack.c.h.b16 %v258
  %v281 = vunpack.c.l.b16 %v259
  %v282 = vunpack.c.h.b16 %v259
  %v283 = vunpack.c.l.b16 %v260
  %v284 = vunpack.c.h.b16 %v260
  %v285 = vpack.c.b16 %v269, %v269
  %v286 = vpack.c.b16 %v270, %v270
  %v287 = vpack.c.b16 %v271, %v271
  %v288 = vpack.c.b16 %v272, %v272
  %v289 = vpack.c.b16 %v273, %v273
  %v290 = vpack.c.b16 %v274, %v274
  %v291 = vpack.c.b16 %v275, %v275
  %v292 = vpack.c.b16 %v276, %v276
  %v293 = vpack.c.b16 %v277, %v277
  %v294 = vpack.c.b16 %v278, %v278
  %v295 = vpack.c.b16 %v279, %v279
  %v296 = vpack.c.b16 %v280, %v280
  %v297 = vpack.c.b16 %v281, %v281
  %v298 = vpack.c.b16 %v282, %v282
  %v299 = vpack.c.b16 %v283, %v283
  %v300 = vpack.c.b16 %v284, %v284
  %317 = vst [vmem:[%s47] sm:$0xf] %v285
  %318 = vst [vmem:[%s47 + $0x4] sm:$0xf] %v286
  %319 = vst [vmem:[%s47 + $0x8] sm:$0xf] %v287
  %320 = vst [vmem:[%s47 + $0xc] sm:$0xf] %v288
  %321 = vst [vmem:[%s47 + $0x10] sm:$0xf] %v289
  %322 = vst [vmem:[%s47 + $0x14] sm:$0xf] %v290
  %323 = vst [vmem:[%s47 + $0x18] sm:$0xf] %v291
  %324 = vst [vmem:[%s47 + $0x1c] sm:$0xf] %v292
  %325 = vst [vmem:[%s47 + $0x20] sm:$0xf] %v293
  %326 = vst [vmem:[%s47 + $0x24] sm:$0xf] %v294
  %327 = vst [vmem:[%s47 + $0x28] sm:$0xf] %v295
  %328 = vst [vmem:[%s47 + $0x2c] sm:$0xf] %v296
  %329 = vst [vmem:[%s47 + $0x30] sm:$0xf] %v297
  %330 = vst [vmem:[%s47 + $0x34] sm:$0xf] %v298
  %331 = vst [vmem:[%s47 + $0x38] sm:$0xf] %v299
  %332 = vst [vmem:[%s47 + $0x3c] sm:$0xf] %v300
  %p333 = scmp.eq.s32.totalorder 0, 0
  // Predicated region
  $region10: #{basic_block_forward.5} parent=0 // pred_check
    %p334 = pneg %p333
  $region11: #{basic_block_forward.5} parent=0 // pred_check_branch
    %336 = sbr.rel (%p334) target = $region13
  $region12: #{basic_block_forward.5} parent=0 // pred_region
    %337 = vst [vmem:[%s3] sm:$0xff] 0.0
    %338 = vst [vmem:[%s4] sm:$0xff] 0.0
  $region13: #{basic_block_forward.5} parent=0 // pred_fallthru
    _
  %v339 = vld [vmem:[%s3] sm:$0xff]
  %v340 = vadd.f32 %v191, %v194
  %v341 = vadd.f32 %v340, %v199
  %v342 = vadd.f32 %v341, %v202
  %v343 = vadd.f32 %v342, %v207
  %v344 = vadd.f32 %v343, %v210
  %v345 = vadd.f32 %v344, %v215
  %v346 = vadd.f32 %v345, %v218
  %v347 = vadd.f32 %v346, %v223
  %v348 = vadd.f32 %v347, %v226
  %v349 = vadd.f32 %v348, %v231
  %v350 = vadd.f32 %v349, %v234
  %v351 = vadd.f32 %v350, %v239
  %v352 = vadd.f32 %v351, %v242
  %v353 = vadd.f32 %v352, %v247
  %v354 = vadd.f32 %v353, %v250
  %v355 = vrot.slane %v354, 4
  %v356 = vadd.f32 %v354, %v355
  %v357 = vrot.slane %v356, 2
  %v358 = vadd.f32 %v356, %v357
  %v359 = vrot.slane %v358, 1
  %v360 = vadd.f32 %v358, %v359
  %v361 = vadd.f32 %v339, %v360
  %362 = vst [vmem:[%s3] sm:$0xff] %v361
  %v363 = vld [vmem:[%s4] sm:$0xff]
  %v364 = vmul.f32 %v191, %v191
  %v365 = vmul.f32 %v194, %v194
  %v366 = vmul.f32 %v199, %v199
  %v367 = vmul.f32 %v202, %v202
  %v368 = vmul.f32 %v207, %v207
  %v369 = vmul.f32 %v210, %v210
  %v370 = vmul.f32 %v215, %v215
  %v371 = vmul.f32 %v218, %v218
  %v372 = vmul.f32 %v223, %v223
  %v373 = vmul.f32 %v226, %v226
  %v374 = vmul.f32 %v231, %v231
  %v375 = vmul.f32 %v234, %v234
  %v376 = vmul.f32 %v239, %v239
  %v377 = vmul.f32 %v242, %v242
  %v378 = vmul.f32 %v247, %v247
  %v379 = vmul.f32 %v250, %v250
  %v380 = vadd.f32 %v364, %v365
  %v381 = vadd.f32 %v380, %v366
  %v382 = vadd.f32 %v381, %v367
  %v383 = vadd.f32 %v382, %v368
  %v384 = vadd.f32 %v383, %v369
  %v385 = vadd.f32 %v384, %v370
  %v386 = vadd.f32 %v385, %v371
  %v387 = vadd.f32 %v386, %v372
  %v388 = vadd.f32 %v387, %v373
  %v389 = vadd.f32 %v388, %v374
  %v390 = vadd.f32 %v389, %v375
  %v391 = vadd.f32 %v390, %v376
  %v392 = vadd.f32 %v391, %v377
  %v393 = vadd.f32 %v392, %v378
  %v394 = vadd.f32 %v393, %v379
  %v395 = vrot.slane %v394, 4
  %v396 = vadd.f32 %v394, %v395
  %v397 = vrot.slane %v396, 2
  %v398 = vadd.f32 %v396, %v397
  %v399 = vrot.slane %v398, 1
  %v400 = vadd.f32 %v398, %v399
  %v401 = vadd.f32 %v363, %v400
  %402 = vst [vmem:[%s4] sm:$0xff] %v401
  %s403 = sadd.s32 0, 0
  %s404 = smul.u32 16, %s403
  %p405 = scmp.lt.s32.totalorder %s404, 15
  %s406 = scalar_select %p405, %s404, 15
  %s407 = smul.addr %s406, 4
  %s408 = scalar_lea.vmem %s2, %s407
  // Predicated region
  $region14: #{basic_block_forward.5} parent=0 // pred_check
    _
  $region15: #{basic_block_forward.5} parent=0 // pred_check_branch
    %410 = sbr.rel (0) target = $region17
  $region16: #{basic_block_forward.5} parent=0 // pred_region
    %s411 = sadd.s32 0, 0
    %s412 = smul.u32 16, %s411
  $region17: #{basic_block_forward.5} parent=0 // pred_fallthru
    _
  // Predicated region
  $region18: #{basic_block_forward.5} parent=0 // pred_check
    _
  $region19: #{basic_block_forward.5} parent=0 // pred_check_branch
    %414 = sbr.rel (0) target = $region21
  $region20: #{basic_block_forward.5} parent=0 // pred_region
    _
  $region21: #{basic_block_forward.5} parent=0 // pred_fallthru
    _
  // Predicated region
  $region22: #{basic_block_forward.5} parent=0 // pred_check
    _
  $region23: #{basic_block_forward.5} parent=0 // pred_check_branch
    %416 = sbr.rel (0) target = $region25
  $region24: #{basic_block_forward.5} parent=0 // pred_region
    _
  $region25: #{basic_block_forward.5} parent=0 // pred_fallthru
    _
  // Predicated region
  $region26: #{basic_block_forward.5} parent=0 // pred_check
    _
  $region27: #{basic_block_forward.5} parent=0 // pred_check_branch
    %418 = sbr.rel (0) target = $region29
  $region28: #{basic_block_forward.5} parent=0 // pred_region
    %s419 = sadd.s32 0, 0
    %s420 = smul.u32 16, %s419
    %p421 = scmp.lt.s32.totalorder %s420, 15
    %s422 = scalar_select %p421, %s420, 15
    %s423 = smul.addr %s422, 4
    %s424 = scalar_lea.vmem %s2, %s423
  $region29: #{basic_block_forward.5} parent=0 // pred_fallthru
    _
  // Predicated region
  $region30: #{basic_block_forward.5} parent=0 // pred_check
    _
  $region31: #{basic_block_forward.5} parent=0 // pred_check_branch
    %426 = sbr.rel (0) target = $region33
  $region32: #{basic_block_forward.5} parent=0 // pred_region
    _
  $region33: #{basic_block_forward.5} parent=0 // pred_fallthru
    _
  // Predicated region
  $region34: #{basic_block_forward.5} parent=0 // pred_check
    _
  $region35: #{basic_block_forward.5} parent=0 // pred_check_branch
    %428 = sbr.rel (0) target = $region37
  $region36: #{basic_block_forward.5} parent=0 // pred_region
    _
  $region37: #{basic_block_forward.5} parent=0 // pred_fallthru
    _

// kernel: basic_block_forward.8
$region0: #{basic_block_forward.8}
  #allocation0 [shape = 'u32[]', space=smem, size = 0x4, offset = 0x4, fixed_abs, tag = 'smem constant byte address 0x4 - core index']
  #allocation1 [shape = 'u32[144,128]{1,0:T(1,128)}', space=vmem, size = 0x12000, scoped, tag = 'internal scratch']
  %s0 = inlined_call_operand.vmem [shape: bf16[128,72], index: 0, kind: input, shape index: {}]
  %s1 = inlined_call_operand.vmem [shape: bf16[72,128], index: 1, kind: input, shape index: {}]
  %s2 = inlined_call_operand.vmem [shape: bf16[128,128], index: 2, kind: output, shape index: {0}]
  %s3 = inlined_call_operand.vmem [shape: f32[8,128], index: 3, kind: output, shape index: {1}]
  %s4 = inlined_call_operand.vmem [shape: f32[8,128], index: 4, kind: output, shape index: {2}]
  %5 = xla_tuple %s2, %s3, %s4
  %s6 = sld [smem:[#allocation0]]
  $region38: #{basic_block_forward.8} parent=0
    _
  %s8 = ssub.s32 1, %s6
  %s9 = scalar_select 0, %s8, %s6
  // Predicated region
  $region2: #{basic_block_forward.8} parent=0 // pred_check
    _
  $region3: #{basic_block_forward.8} parent=0 // pred_check_branch
    %11 = sbr.rel (0) target = $region5
  $region4: #{basic_block_forward.8} parent=0 // pred_region
    %s12 = sadd.s32 0, 0
    %s13 = smul.u32 16, %s12
    %p14 = scmp.lt.s32.totalorder %s13, 15
    %s15 = scalar_select %p14, %s13, 15
    %s16 = smul.addr %s15, 4
    %s17 = scalar_lea.vmem %s0, %s16
    %s18 = sadd.s32 0, 0
    %s19 = smul.u32 16, %s18
  $region5: #{basic_block_forward.8} parent=0 // pred_fallthru
    _
  // Predicated region
  $region6: #{basic_block_forward.8} parent=0 // pred_check
    _
  $region7: #{basic_block_forward.8} parent=0 // pred_check_branch
    %21 = sbr.rel (0) target = $region9
  $region8: #{basic_block_forward.8} parent=0 // pred_region
    _
  $region9: #{basic_block_forward.8} parent=0 // pred_fallthru
    _
  %s22 = sadd.s32 0, 0
  %s23 = smul.u32 16, %s22
  %p24 = scmp.lt.s32.totalorder %s23, 15
  %s25 = scalar_select %p24, %s23, 15
  %s26 = smul.addr %s25, 4
  %s27 = scalar_lea.vmem %s0, %s26
  %s28 = sadd.s32 0, 0
  %s29 = smul.u32 16, %s28
  %p30 = scmp.lt.s32.totalorder %s29, 15
  %s31 = scalar_select %p30, %s29, 15
  %s32 = smul.addr %s31, 4
  %s33 = scalar_lea.vmem %s2, %s32
  %s34 = sadd.s32 0, 0
  %s35 = smul.u32 16, %s34
  %p36 = scmp.lt.s32.totalorder %s35, 15
  %s37 = scalar_select %p36, %s35, 15
  %s38 = smul.addr %s37, 4
  %s39 = scalar_lea.vmem %s0, %s38
  %s40 = sadd.s32 0, 0
  %s41 = smul.u32 16, %s40
  %s42 = sadd.s32 0, 0
  %s43 = smul.u32 16, %s42
  %p44 = scmp.lt.s32.totalorder %s43, 15
  %s45 = scalar_select %p44, %s43, 15
  %s46 = smul.addr %s45, 4
  %s47 = scalar_lea.vmem %s2, %s46
  %s48 = sadd.s32 0, 0
  %s49 = smul.u32 16, %s48
  %v51 = vld [vmem:[%s39] sm:$0xf]
  %v52 = vld [vmem:[%s39 + $0x4] sm:$0xf]
  %v53 = vld [vmem:[%s39 + $0x8] sm:$0xf]
  %v54 = vld [vmem:[%s39 + $0xc] sm:$0xf]
  %v55 = vld [vmem:[%s39 + $0x10] sm:$0xf]
  %v56 = vld [vmem:[%s39 + $0x14] sm:$0xf]
  %v57 = vld [vmem:[%s39 + $0x18] sm:$0xf]
  %v58 = vld [vmem:[%s39 + $0x1c] sm:$0xf]
  %v59 = vld [vmem:[%s39 + $0x20] sm:$0xf]
  %v60 = vld [vmem:[%s39 + $0x24] sm:$0xf]
  %v61 = vld [vmem:[%s39 + $0x28] sm:$0xf]
  %v62 = vld [vmem:[%s39 + $0x2c] sm:$0xf]
  %v63 = vld [vmem:[%s39 + $0x30] sm:$0xf]
  %v64 = vld [vmem:[%s39 + $0x34] sm:$0xf]
  %v65 = vld [vmem:[%s39 + $0x38] sm:$0xf]
  %v66 = vld [vmem:[%s39 + $0x3c] sm:$0xf]
  %v67 = vld [vmem:[%s1] sm:$0xf]
  %v68 = vld [vmem:[%s1 + $0x4] sm:$0xf]
  %v69 = vld [vmem:[%s1 + $0x8] sm:$0xf]
  %v70 = vld [vmem:[%s1 + $0xc] sm:$0xf]
  %v71 = vld [vmem:[%s1 + $0x10] sm:$0xf]
  %v72 = vld [vmem:[%s1 + $0x14] sm:$0xf]
  %v73 = vld [vmem:[%s1 + $0x18] sm:$0xf]
  %v74 = vld [vmem:[%s1 + $0x1c] sm:$0xf]
  %v75 = vld [vmem:[%s1 + $0x20] sm:$0xf]
  %v92 = vunpack.c.l.b16 %v51
  %v93 = vunpack.c.l.b16 %v52
  %v94 = vunpack.c.l.b16 %v53
  %v95 = vunpack.c.l.b16 %v54
  %v96 = vunpack.c.l.b16 %v55
  %v97 = vunpack.c.l.b16 %v56
  %v98 = vunpack.c.l.b16 %v57
  %v99 = vunpack.c.l.b16 %v58
  %v100 = vunpack.c.l.b16 %v59
  %v101 = vunpack.c.l.b16 %v60
  %v102 = vunpack.c.l.b16 %v61
  %v103 = vunpack.c.l.b16 %v62
  %v104 = vunpack.c.l.b16 %v63
  %v105 = vunpack.c.l.b16 %v64
  %v106 = vunpack.c.l.b16 %v65
  %v107 = vunpack.c.l.b16 %v66
  %v108 = vpack.c.b16 %v93, %v92
  %v109 = vpack.c.b16 %v95, %v94
  %v110 = vpack.c.b16 %v97, %v96
  %v111 = vpack.c.b16 %v99, %v98
  %v112 = vpack.c.b16 %v101, %v100
  %v113 = vpack.c.b16 %v103, %v102
  %v114 = vpack.c.b16 %v105, %v104
  %v115 = vpack.c.b16 %v107, %v106
  %v125 = vunpack.c.l.b16 %v67
  %v126 = vunpack.c.l.b16 %v68
  %v127 = vunpack.c.l.b16 %v69
  %v128 = vunpack.c.l.b16 %v70
  %v129 = vunpack.c.l.b16 %v71
  %v130 = vunpack.c.l.b16 %v72
  %v131 = vunpack.c.l.b16 %v73
  %v132 = vunpack.c.l.b16 %v74
  %v133 = vunpack.c.l.b16 %v75
  %v134 = vpack.c.b16 %v126, %v125
  %v135 = vpack.c.b16 %v128, %v127
  %v136 = vpack.c.b16 %v130, %v129
  %v137 = vpack.c.b16 %v132, %v131
  %v138 = vpack.c.b16 %v133, %v133
  %vm143 = vcmask 588800
  %v145 = vsel %vm143, %v108, 0
  %v148 = vsel %vm143, %v109, 0
  %v151 = vsel %vm143, %v110, 0
  %v154 = vsel %vm143, %v111, 0
  %v157 = vsel %vm143, %v112, 0
  %v160 = vsel %vm143, %v113, 0
  %v163 = vsel %vm143, %v114, 0
  %v166 = vsel %vm143, %v115, 0
  %vm168 = vcmask 1043456
  %v170 = vsel %vm168, %v138, 0
  %172 = vmatprep.subr.bf16.mxu0 0
  %173 = vmatpush1.bf16.msra.mxu0 %v134
  %174 = vmatprep.subr.bf16.mxu0 0
  %175 = vmatpush1.bf16.msra.mxu0 %v135
  %176 = vmatprep.subr.bf16.mxu0 0
  %177 = vmatpush1.bf16.msra.mxu0 %v136
  %178 = vmatprep.subr.bf16.mxu0 0
  %179 = vmatpush1.bf16.msra.mxu0 %v137
  %180 = vmatprep.subr.bf16.mxu0 0
  %181 = vmatpush1.bf16.msra.mxu0 %v170
  %182 = vmatprep.subr.bf16.mxu0 0
  %183 = vmatpush1.bf16.msra.mxu0 0
  %184 = vmatprep.subr.bf16.mxu0 0
  %185 = vmatpush1.bf16.msra.mxu0 0
  %186 = vmatprep.subr.bf16.mxu0 0
  %187 = vmatpush1.bf16.msra.mxu0 0
  %188 = vmatprep.subr.bf16.mxu0 0
  %189 = vmatpush1.bf16.msra.mxu0 0
  %190 = vmatprep.subr.bf16.mxu0 0
  %191 = vmatpush1.bf16.msra.mxu0 0
  %192 = vmatprep.subr.bf16.mxu0 0
  %193 = vmatpush1.bf16.msra.mxu0 0
  %194 = vmatprep.subr.bf16.mxu0 0
  %195 = vmatpush1.bf16.msra.mxu0 0
  %196 = vmatprep.subr.bf16.mxu0 0
  %197 = vmatpush1.bf16.msra.mxu0 0
  %198 = vmatprep.subr.bf16.mxu0 0
  %199 = vmatpush1.bf16.msra.mxu0 0
  %200 = vmatprep.subr.bf16.mxu0 0
  %201 = vmatpush1.bf16.msra.mxu0 0
  %202 = vmatprep.subr.bf16.mxu0 0
  %203 = vmatpush1.bf16.msra.mxu0 0
  %204 = vmatprep.mubr.bf16.mxu0 0
  %205 = vmatmul.mubr.bf16.gmra.mrb[0].mxu0 %v145
  %v206 = vpop.f32.mrb[0].mxu0
  %v207 = vadd.f32 0.0, %v206
  %v208 = vpop.f32.mrb[0].mxu0
  %v209 = vpop.f32.mrb[0].mxu0
  %v210 = vadd.f32 0.0, %v209
  %v211 = vpop.f32.mrb[0].mxu0
  %212 = vmatprep.mubr.bf16.mxu0 0
  %213 = vmatmul.mubr.bf16.gmra.mrb[0].mxu0 %v148
  %v214 = vpop.f32.mrb[0].mxu0
  %v215 = vadd.f32 0.0, %v214
  %v216 = vpop.f32.mrb[0].mxu0
  %v217 = vpop.f32.mrb[0].mxu0
  %v218 = vadd.f32 0.0, %v217
  %v219 = vpop.f32.mrb[0].mxu0
  %220 = vmatprep.mubr.bf16.mxu0 0
  %221 = vmatmul.mubr.bf16.gmra.mrb[0].mxu0 %v151
  %v222 = vpop.f32.mrb[0].mxu0
  %v223 = vadd.f32 0.0, %v222
  %v224 = vpop.f32.mrb[0].mxu0
  %v225 = vpop.f32.mrb[0].mxu0
  %v226 = vadd.f32 0.0, %v225
  %v227 = vpop.f32.mrb[0].mxu0
  %228 = vmatprep.mubr.bf16.mxu0 0
  %229 = vmatmul.mubr.bf16.gmra.mrb[0].mxu0 %v154
  %v230 = vpop.f32.mrb[0].mxu0
  %v231 = vadd.f32 0.0, %v230
  %v232 = vpop.f32.mrb[0].mxu0
  %v233 = vpop.f32.mrb[0].mxu0
  %v234 = vadd.f32 0.0, %v233
  %v235 = vpop.f32.mrb[0].mxu0
  %236 = vmatprep.mubr.bf16.mxu0 0
  %237 = vmatmul.mubr.bf16.gmra.mrb[0].mxu0 %v157
  %v238 = vpop.f32.mrb[0].mxu0
  %v239 = vadd.f32 0.0, %v238
  %v240 = vpop.f32.mrb[0].mxu0
  %v241 = vpop.f32.mrb[0].mxu0
  %v242 = vadd.f32 0.0, %v241
  %v243 = vpop.f32.mrb[0].mxu0
  %244 = vmatprep.mubr.bf16.mxu0 0
  %245 = vmatmul.mubr.bf16.gmra.mrb[0].mxu0 %v160
  %v246 = vpop.f32.mrb[0].mxu0
  %v247 = vadd.f32 0.0, %v246
  %v248 = vpop.f32.mrb[0].mxu0
  %v249 = vpop.f32.mrb[0].mxu0
  %v250 = vadd.f32 0.0, %v249
  %v251 = vpop.f32.mrb[0].mxu0
  %252 = vmatprep.mubr.bf16.mxu0 0
  %253 = vmatmul.mubr.bf16.gmra.mrb[0].mxu0 %v163
  %v254 = vpop.f32.mrb[0].mxu0
  %v255 = vadd.f32 0.0, %v254
  %v256 = vpop.f32.mrb[0].mxu0
  %v257 = vpop.f32.mrb[0].mxu0
  %v258 = vadd.f32 0.0, %v257
  %v259 = vpop.f32.mrb[0].mxu0
  %260 = vmatprep.mubr.bf16.mxu0 0
  %261 = vmatmul.mubr.bf16.gmra.mrb[0].mxu0 %v166
  %v262 = vpop.f32.mrb[0].mxu0
  %v263 = vadd.f32 0.0, %v262
  %v264 = vpop.f32.mrb[0].mxu0
  %v265 = vpop.f32.mrb[0].mxu0
  %v266 = vadd.f32 0.0, %v265
  %v267 = vpop.f32.mrb[0].mxu0
  %268 = vdwg.mxu0
  %v269 = vpack.c.bf16 %v210, %v207
  %v270 = vpack.c.bf16 %v218, %v215
  %v271 = vpack.c.bf16 %v226, %v223
  %v272 = vpack.c.bf16 %v234, %v231
  %v273 = vpack.c.bf16 %v242, %v239
  %v274 = vpack.c.bf16 %v250, %v247
  %v275 = vpack.c.bf16 %v258, %v255
  %v276 = vpack.c.bf16 %v266, %v263
  %v285 = vunpack.c.l.b16 %v269
  %v286 = vunpack.c.h.b16 %v269
  %v287 = vunpack.c.l.b16 %v270
  %v288 = vunpack.c.h.b16 %v270
  %v289 = vunpack.c.l.b16 %v271
  %v290 = vunpack.c.h.b16 %v271
  %v291 = vunpack.c.l.b16 %v272
  %v292 = vunpack.c.h.b16 %v272
  %v293 = vunpack.c.l.b16 %v273
  %v294 = vunpack.c.h.b16 %v273
  %v295 = vunpack.c.l.b16 %v274
  %v296 = vunpack.c.h.b16 %v274
  %v297 = vunpack.c.l.b16 %v275
  %v298 = vunpack.c.h.b16 %v275
  %v299 = vunpack.c.l.b16 %v276
  %v300 = vunpack.c.h.b16 %v276
  %v301 = vpack.c.b16 %v285, %v285
  %v302 = vpack.c.b16 %v286, %v286
  %v303 = vpack.c.b16 %v287, %v287
  %v304 = vpack.c.b16 %v288, %v288
  %v305 = vpack.c.b16 %v289, %v289
  %v306 = vpack.c.b16 %v290, %v290
  %v307 = vpack.c.b16 %v291, %v291
  %v308 = vpack.c.b16 %v292, %v292
  %v309 = vpack.c.b16 %v293, %v293
  %v310 = vpack.c.b16 %v294, %v294
  %v311 = vpack.c.b16 %v295, %v295
  %v312 = vpack.c.b16 %v296, %v296
  %v313 = vpack.c.b16 %v297, %v297
  %v314 = vpack.c.b16 %v298, %v298
  %v315 = vpack.c.b16 %v299, %v299
  %v316 = vpack.c.b16 %v300, %v300
  %333 = vst [vmem:[%s47] sm:$0xf] %v301
  %334 = vst [vmem:[%s47 + $0x4] sm:$0xf] %v302
  %335 = vst [vmem:[%s47 + $0x8] sm:$0xf] %v303
  %336 = vst [vmem:[%s47 + $0xc] sm:$0xf] %v304
  %337 = vst [vmem:[%s47 + $0x10] sm:$0xf] %v305
  %338 = vst [vmem:[%s47 + $0x14] sm:$0xf] %v306
  %339 = vst [vmem:[%s47 + $0x18] sm:$0xf] %v307
  %340 = vst [vmem:[%s47 + $0x1c] sm:$0xf] %v308
  %341 = vst [vmem:[%s47 + $0x20] sm:$0xf] %v309
  %342 = vst [vmem:[%s47 + $0x24] sm:$0xf] %v310
  %343 = vst [vmem:[%s47 + $0x28] sm:$0xf] %v311
  %344 = vst [vmem:[%s47 + $0x2c] sm:$0xf] %v312
  %345 = vst [vmem:[%s47 + $0x30] sm:$0xf] %v313
  %346 = vst [vmem:[%s47 + $0x34] sm:$0xf] %v314
  %347 = vst [vmem:[%s47 + $0x38] sm:$0xf] %v315
  %348 = vst [vmem:[%s47 + $0x3c] sm:$0xf] %v316
  %p349 = scmp.eq.s32.totalorder 0, 0
  // Predicated region
  $region10: #{basic_block_forward.8} parent=0 // pred_check
    %p350 = pneg %p349
  $region11: #{basic_block_forward.8} parent=0 // pred_check_branch
    %352 = sbr.rel (%p350) target = $region13
  $region12: #{basic_block_forward.8} parent=0 // pred_region
    %353 = vst [vmem:[%s3] sm:$0xff] 0.0
    %354 = vst [vmem:[%s4] sm:$0xff] 0.0
  $region13: #{basic_block_forward.8} parent=0 // pred_fallthru
    _
  %v355 = vld [vmem:[%s3] sm:$0xff]
  %v356 = vadd.f32 %v207, %v210
  %v357 = vadd.f32 %v356, %v215
  %v358 = vadd.f32 %v357, %v218
  %v359 = vadd.f32 %v358, %v223
  %v360 = vadd.f32 %v359, %v226
  %v361 = vadd.f32 %v360, %v231
  %v362 = vadd.f32 %v361, %v234
  %v363 = vadd.f32 %v362, %v239
  %v364 = vadd.f32 %v363, %v242
  %v365 = vadd.f32 %v364, %v247
  %v366 = vadd.f32 %v365, %v250
  %v367 = vadd.f32 %v366, %v255
  %v368 = vadd.f32 %v367, %v258
  %v369 = vadd.f32 %v368, %v263
  %v370 = vadd.f32 %v369, %v266
  %v371 = vrot.slane %v370, 4
  %v372 = vadd.f32 %v370, %v371
  %v373 = vrot.slane %v372, 2
  %v374 = vadd.f32 %v372, %v373
  %v375 = vrot.slane %v374, 1
  %v376 = vadd.f32 %v374, %v375
  %v377 = vadd.f32 %v355, %v376
  %378 = vst [vmem:[%s3] sm:$0xff] %v377
  %v379 = vld [vmem:[%s4] sm:$0xff]
  %v380 = vmul.f32 %v207, %v207
  %v381 = vmul.f32 %v210, %v210
  %v382 = vmul.f32 %v215, %v215
  %v383 = vmul.f32 %v218, %v218
  %v384 = vmul.f32 %v223, %v223
  %v385 = vmul.f32 %v226, %v226
  %v386 = vmul.f32 %v231, %v231
  %v387 = vmul.f32 %v234, %v234
  %v388 = vmul.f32 %v239, %v239
  %v389 = vmul.f32 %v242, %v242
  %v390 = vmul.f32 %v247, %v247
  %v391 = vmul.f32 %v250, %v250
  %v392 = vmul.f32 %v255, %v255
  %v393 = vmul.f32 %v258, %v258
  %v394 = vmul.f32 %v263, %v263
  %v395 = vmul.f32 %v266, %v266
  %v396 = vadd.f32 %v380, %v381
  %v397 = vadd.f32 %v396, %v382
  %v398 = vadd.f32 %v397, %v383
  %v399 = vadd.f32 %v398, %v384
  %v400 = vadd.f32 %v399, %v385
  %v401 = vadd.f32 %v400, %v386
  %v402 = vadd.f32 %v401, %v387
  %v403 = vadd.f32 %v402, %v388
  %v404 = vadd.f32 %v403, %v389
  %v405 = vadd.f32 %v404, %v390
  %v406 = vadd.f32 %v405, %v391
  %v407 = vadd.f32 %v406, %v392
  %v408 = vadd.f32 %v407, %v393
  %v409 = vadd.f32 %v408, %v394
  %v410 = vadd.f32 %v409, %v395
  %v411 = vrot.slane %v410, 4
  %v412 = vadd.f32 %v410, %v411
  %v413 = vrot.slane %v412, 2
  %v414 = vadd.f32 %v412, %v413
  %v415 = vrot.slane %v414, 1
  %v416 = vadd.f32 %v414, %v415
  %v417 = vadd.f32 %v379, %v416
  %418 = vst [vmem:[%s4] sm:$0xff] %v417
  %s419 = sadd.s32 0, 0
  %s420 = smul.u32 16, %s419
  %p421 = scmp.lt.s32.totalorder %s420, 15
  %s422 = scalar_select %p421, %s420, 15
  %s423 = smul.addr %s422, 4
  %s424 = scalar_lea.vmem %s2, %s423
  // Predicated region
  $region14: #{basic_block_forward.8} parent=0 // pred_check
    _
  $region15: #{basic_block_forward.8} parent=0 // pred_check_branch
    %426 = sbr.rel (0) target = $region17
  $region16: #{basic_block_forward.8} parent=0 // pred_region
    %s427 = sadd.s32 0, 0
    %s428 = smul.u32 16, %s427
  $region17: #{basic_block_forward.8} parent=0 // pred_fallthru
    _
  // Predicated region
  $region18: #{basic_block_forward.8} parent=0 // pred_check
    _
  $region19: #{basic_block_forward.8} parent=0 // pred_check_branch
    %430 = sbr.rel (0) target = $region21
  $region20: #{basic_block_forward.8} parent=0 // pred_region
    _
  $region21: #{basic_block_forward.8} parent=0 // pred_fallthru
    _
  // Predicated region
  $region22: #{basic_block_forward.8} parent=0 // pred_check
    _
  $region23: #{basic_block_forward.8} parent=0 // pred_check_branch
    %432 = sbr.rel (0) target = $region25
  $region24: #{basic_block_forward.8} parent=0 // pred_region
    _
  $region25: #{basic_block_forward.8} parent=0 // pred_fallthru
    _
  // Predicated region
  $region26: #{basic_block_forward.8} parent=0 // pred_check
    _
  $region27: #{basic_block_forward.8} parent=0 // pred_check_branch
    %434 = sbr.rel (0) target = $region29
  $region28: #{basic_block_forward.8} parent=0 // pred_region
    %s435 = sadd.s32 0, 0
    %s436 = smul.u32 16, %s435
    %p437 = scmp.lt.s32.totalorder %s436, 15
    %s438 = scalar_select %p437, %s436, 15
    %s439 = smul.addr %s438, 4
    %s440 = scalar_lea.vmem %s2, %s439
  $region29: #{basic_block_forward.8} parent=0 // pred_fallthru
    _
  // Predicated region
  $region30: #{basic_block_forward.8} parent=0 // pred_check
    _
  $region31: #{basic_block_forward.8} parent=0 // pred_check_branch
    %442 = sbr.rel (0) target = $region33
  $region32: #{basic_block_forward.8} parent=0 // pred_region
    _
  $region33: #{basic_block_forward.8} parent=0 // pred_fallthru
    _
  // Predicated region
  $region34: #{basic_block_forward.8} parent=0 // pred_check
    _
  $region35: #{basic_block_forward.8} parent=0 // pred_check_branch
    %444 = sbr.rel (0) target = $region37
  $region36: #{basic_block_forward.8} parent=0 // pred_region
    _
  $region37: #{basic_block_forward.8} parent=0 // pred_fallthru
    _

// kernel: basic_block_forward.7
$region0: #{basic_block_forward.7}
  #allocation0 [shape = 'u32[]', space=smem, size = 0x4, offset = 0x4, fixed_abs, tag = 'smem constant byte address 0x4 - core index']
  #allocation1 [shape = 'u32[144,128]{1,0:T(1,128)}', space=vmem, size = 0x12000, scoped, tag = 'internal scratch']
  %s0 = inlined_call_operand.vmem [shape: bf16[128,4], index: 0, kind: input, shape index: {}]
  %s1 = inlined_call_operand.vmem [shape: bf16[4,128], index: 1, kind: input, shape index: {}]
  %s2 = inlined_call_operand.vmem [shape: bf16[128,128], index: 2, kind: output, shape index: {0}]
  %s3 = inlined_call_operand.vmem [shape: f32[8,128], index: 3, kind: output, shape index: {1}]
  %s4 = inlined_call_operand.vmem [shape: f32[8,128], index: 4, kind: output, shape index: {2}]
  %5 = xla_tuple %s2, %s3, %s4
  %s6 = sld [smem:[#allocation0]]
  $region38: #{basic_block_forward.7} parent=0
    _
  %s8 = ssub.s32 1, %s6
  %s9 = scalar_select 0, %s8, %s6
  // Predicated region
  $region2: #{basic_block_forward.7} parent=0 // pred_check
    _
  $region3: #{basic_block_forward.7} parent=0 // pred_check_branch
    %11 = sbr.rel (0) target = $region5
  $region4: #{basic_block_forward.7} parent=0 // pred_region
    %s12 = sadd.s32 0, 0
    %s13 = smul.u32 16, %s12
    %p14 = scmp.lt.s32.totalorder %s13, 15
    %s15 = scalar_select %p14, %s13, 15
    %s16 = smul.addr %s15, 4
    %s17 = scalar_lea.vmem %s0, %s16
    %s18 = sadd.s32 0, 0
    %s19 = smul.u32 16, %s18
  $region5: #{basic_block_forward.7} parent=0 // pred_fallthru
    _
  // Predicated region
  $region6: #{basic_block_forward.7} parent=0 // pred_check
    _
  $region7: #{basic_block_forward.7} parent=0 // pred_check_branch
    %21 = sbr.rel (0) target = $region9
  $region8: #{basic_block_forward.7} parent=0 // pred_region
    _
  $region9: #{basic_block_forward.7} parent=0 // pred_fallthru
    _
  %s22 = sadd.s32 0, 0
  %s23 = smul.u32 16, %s22
  %p24 = scmp.lt.s32.totalorder %s23, 15
  %s25 = scalar_select %p24, %s23, 15
  %s26 = smul.addr %s25, 4
  %s27 = scalar_lea.vmem %s0, %s26
  %s28 = sadd.s32 0, 0
  %s29 = smul.u32 16, %s28
  %p30 = scmp.lt.s32.totalorder %s29, 15
  %s31 = scalar_select %p30, %s29, 15
  %s32 = smul.addr %s31, 4
  %s33 = scalar_lea.vmem %s2, %s32
  %s34 = sadd.s32 0, 0
  %s35 = smul.u32 16, %s34
  %p36 = scmp.lt.s32.totalorder %s35, 15
  %s37 = scalar_select %p36, %s35, 15
  %s38 = smul.addr %s37, 4
  %s39 = scalar_lea.vmem %s0, %s38
  %s40 = sadd.s32 0, 0
  %s41 = smul.u32 16, %s40
  %s42 = sadd.s32 0, 0
  %s43 = smul.u32 16, %s42
  %p44 = scmp.lt.s32.totalorder %s43, 15
  %s45 = scalar_select %p44, %s43, 15
  %s46 = smul.addr %s45, 4
  %s47 = scalar_lea.vmem %s2, %s46
  %s48 = sadd.s32 0, 0
  %s49 = smul.u32 16, %s48
  %v51 = vld [vmem:[%s39] sm:$0xf]
  %v52 = vld [vmem:[%s39 + $0x4] sm:$0xf]
  %v53 = vld [vmem:[%s39 + $0x8] sm:$0xf]
  %v54 = vld [vmem:[%s39 + $0xc] sm:$0xf]
  %v55 = vld [vmem:[%s39 + $0x10] sm:$0xf]
  %v56 = vld [vmem:[%s39 + $0x14] sm:$0xf]
  %v57 = vld [vmem:[%s39 + $0x18] sm:$0xf]
  %v58 = vld [vmem:[%s39 + $0x1c] sm:$0xf]
  %v59 = vld [vmem:[%s39 + $0x20] sm:$0xf]
  %v60 = vld [vmem:[%s39 + $0x24] sm:$0xf]
  %v61 = vld [vmem:[%s39 + $0x28] sm:$0xf]
  %v62 = vld [vmem:[%s39 + $0x2c] sm:$0xf]
  %v63 = vld [vmem:[%s39 + $0x30] sm:$0xf]
  %v64 = vld [vmem:[%s39 + $0x34] sm:$0xf]
  %v65 = vld [vmem:[%s39 + $0x38] sm:$0xf]
  %v66 = vld [vmem:[%s39 + $0x3c] sm:$0xf]
  %v67 = vld [vmem:[%s1] sm:$0x3]
  %v84 = vunpack.c.l.b16 %v51
  %v85 = vunpack.c.l.b16 %v52
  %v86 = vunpack.c.l.b16 %v53
  %v87 = vunpack.c.l.b16 %v54
  %v88 = vunpack.c.l.b16 %v55
  %v89 = vunpack.c.l.b16 %v56
  %v90 = vunpack.c.l.b16 %v57
  %v91 = vunpack.c.l.b16 %v58
  %v92 = vunpack.c.l.b16 %v59
  %v93 = vunpack.c.l.b16 %v60
  %v94 = vunpack.c.l.b16 %v61
  %v95 = vunpack.c.l.b16 %v62
  %v96 = vunpack.c.l.b16 %v63
  %v97 = vunpack.c.l.b16 %v64
  %v98 = vunpack.c.l.b16 %v65
  %v99 = vunpack.c.l.b16 %v66
  %v100 = vpack.c.b16 %v85, %v84
  %v101 = vpack.c.b16 %v87, %v86
  %v102 = vpack.c.b16 %v89, %v88
  %v103 = vpack.c.b16 %v91, %v90
  %v104 = vpack.c.b16 %v93, %v92
  %v105 = vpack.c.b16 %v95, %v94
  %v106 = vpack.c.b16 %v97, %v96
  %v107 = vpack.c.b16 %v99, %v98
  %vm108 = vcmask 31744
  %v110 = vsel %vm108, %v100, 0
  %v113 = vsel %vm108, %v101, 0
  %v116 = vsel %vm108, %v102, 0
  %v119 = vsel %vm108, %v103, 0
  %v122 = vsel %vm108, %v104, 0
  %v125 = vsel %vm108, %v105, 0
  %v128 = vsel %vm108, %v106, 0
  %v131 = vsel %vm108, %v107, 0
  %vm133 = vcmask 1041408
  %v135 = vsel %vm133, %v67, 0
  %137 = vmatprep.subr.bf16.mxu0 0
  %138 = vmatpush1.bf16.msra.mxu0 %v135
  %139 = vmatprep.subr.bf16.mxu0 0
  %140 = vmatpush1.bf16.msra.mxu0 0
  %141 = vmatprep.subr.bf16.mxu0 0
  %142 = vmatpush1.bf16.msra.mxu0 0
  %143 = vmatprep.subr.bf16.mxu0 0
  %144 = vmatpush1.bf16.msra.mxu0 0
  %145 = vmatprep.subr.bf16.mxu0 0
  %146 = vmatpush1.bf16.msra.mxu0 0
  %147 = vmatprep.subr.bf16.mxu0 0
  %148 = vmatpush1.bf16.msra.mxu0 0
  %149 = vmatprep.subr.bf16.mxu0 0
  %150 = vmatpush1.bf16.msra.mxu0 0
  %151 = vmatprep.subr.bf16.mxu0 0
  %152 = vmatpush1.bf16.msra.mxu0 0
  %153 = vmatprep.subr.bf16.mxu0 0
  %154 = vmatpush1.bf16.msra.mxu0 0
  %155 = vmatprep.subr.bf16.mxu0 0
  %156 = vmatpush1.bf16.msra.mxu0 0
  %157 = vmatprep.subr.bf16.mxu0 0
  %158 = vmatpush1.bf16.msra.mxu0 0
  %159 = vmatprep.subr.bf16.mxu0 0
  %160 = vmatpush1.bf16.msra.mxu0 0
  %161 = vmatprep.subr.bf16.mxu0 0
  %162 = vmatpush1.bf16.msra.mxu0 0
  %163 = vmatprep.subr.bf16.mxu0 0
  %164 = vmatpush1.bf16.msra.mxu0 0
  %165 = vmatprep.subr.bf16.mxu0 0
  %166 = vmatpush1.bf16.msra.mxu0 0
  %167 = vmatprep.subr.bf16.mxu0 0
  %168 = vmatpush1.bf16.msra.mxu0 0
  %169 = vmatprep.mubr.bf16.mxu0 0
  %170 = vmatmul.mubr.bf16.gmra.mrb[0].mxu0 %v110
  %v171 = vpop.f32.mrb[0].mxu0
  %v172 = vadd.f32 0.0, %v171
  %v173 = vpop.f32.mrb[0].mxu0
  %v174 = vpop.f32.mrb[0].mxu0
  %v175 = vadd.f32 0.0, %v174
  %v176 = vpop.f32.mrb[0].mxu0
  %177 = vmatprep.mubr.bf16.mxu0 0
  %178 = vmatmul.mubr.bf16.gmra.mrb[0].mxu0 %v113
  %v179 = vpop.f32.mrb[0].mxu0
  %v180 = vadd.f32 0.0, %v179
  %v181 = vpop.f32.mrb[0].mxu0
  %v182 = vpop.f32.mrb[0].mxu0
  %v183 = vadd.f32 0.0, %v182
  %v184 = vpop.f32.mrb[0].mxu0
  %185 = vmatprep.mubr.bf16.mxu0 0
  %186 = vmatmul.mubr.bf16.gmra.mrb[0].mxu0 %v116
  %v187 = vpop.f32.mrb[0].mxu0
  %v188 = vadd.f32 0.0, %v187
  %v189 = vpop.f32.mrb[0].mxu0
  %v190 = vpop.f32.mrb[0].mxu0
  %v191 = vadd.f32 0.0, %v190
  %v192 = vpop.f32.mrb[0].mxu0
  %193 = vmatprep.mubr.bf16.mxu0 0
  %194 = vmatmul.mubr.bf16.gmra.mrb[0].mxu0 %v119
  %v195 = vpop.f32.mrb[0].mxu0
  %v196 = vadd.f32 0.0, %v195
  %v197 = vpop.f32.mrb[0].mxu0
  %v198 = vpop.f32.mrb[0].mxu0
  %v199 = vadd.f32 0.0, %v198
  %v200 = vpop.f32.mrb[0].mxu0
  %201 = vmatprep.mubr.bf16.mxu0 0
  %202 = vmatmul.mubr.bf16.gmra.mrb[0].mxu0 %v122
  %v203 = vpop.f32.mrb[0].mxu0
  %v204 = vadd.f32 0.0, %v203
  %v205 = vpop.f32.mrb[0].mxu0
  %v206 = vpop.f32.mrb[0].mxu0
  %v207 = vadd.f32 0.0, %v206
  %v208 = vpop.f32.mrb[0].mxu0
  %209 = vmatprep.mubr.bf16.mxu0 0
  %210 = vmatmul.mubr.bf16.gmra.mrb[0].mxu0 %v125
  %v211 = vpop.f32.mrb[0].mxu0
  %v212 = vadd.f32 0.0, %v211
  %v213 = vpop.f32.mrb[0].mxu0
  %v214 = vpop.f32.mrb[0].mxu0
  %v215 = vadd.f32 0.0, %v214
  %v216 = vpop.f32.mrb[0].mxu0
  %217 = vmatprep.mubr.bf16.mxu0 0
  %218 = vmatmul.mubr.bf16.gmra.mrb[0].mxu0 %v128
  %v219 = vpop.f32.mrb[0].mxu0
  %v220 = vadd.f32 0.0, %v219
  %v221 = vpop.f32.mrb[0].mxu0
  %v222 = vpop.f32.mrb[0].mxu0
  %v223 = vadd.f32 0.0, %v222
  %v224 = vpop.f32.mrb[0].mxu0
  %225 = vmatprep.mubr.bf16.mxu0 0
  %226 = vmatmul.mubr.bf16.gmra.mrb[0].mxu0 %v131
  %v227 = vpop.f32.mrb[0].mxu0
  %v228 = vadd.f32 0.0, %v227
  %v229 = vpop.f32.mrb[0].mxu0
  %v230 = vpop.f32.mrb[0].mxu0
  %v231 = vadd.f32 0.0, %v230
  %v232 = vpop.f32.mrb[0].mxu0
  %233 = vdwg.mxu0
  %v234 = vpack.c.bf16 %v175, %v172
  %v235 = vpack.c.bf16 %v183, %v180
  %v236 = vpack.c.bf16 %v191, %v188
  %v237 = vpack.c.bf16 %v199, %v196
  %v238 = vpack.c.bf16 %v207, %v204
  %v239 = vpack.c.bf16 %v215, %v212
  %v240 = vpack.c.bf16 %v223, %v220
  %v241 = vpack.c.bf16 %v231, %v228
  %v250 = vunpack.c.l.b16 %v234
  %v251 = vunpack.c.h.b16 %v234
  %v252 = vunpack.c.l.b16 %v235
  %v253 = vunpack.c.h.b16 %v235
  %v254 = vunpack.c.l.b16 %v236
  %v255 = vunpack.c.h.b16 %v236
  %v256 = vunpack.c.l.b16 %v237
  %v257 = vunpack.c.h.b16 %v237
  %v258 = vunpack.c.l.b16 %v238
  %v259 = vunpack.c.h.b16 %v238
  %v260 = vunpack.c.l.b16 %v239
  %v261 = vunpack.c.h.b16 %v239
  %v262 = vunpack.c.l.b16 %v240
  %v263 = vunpack.c.h.b16 %v240
  %v264 = vunpack.c.l.b16 %v241
  %v265 = vunpack.c.h.b16 %v241
  %v266 = vpack.c.b16 %v250, %v250
  %v267 = vpack.c.b16 %v251, %v251
  %v268 = vpack.c.b16 %v252, %v252
  %v269 = vpack.c.b16 %v253, %v253
  %v270 = vpack.c.b16 %v254, %v254
  %v271 = vpack.c.b16 %v255, %v255
  %v272 = vpack.c.b16 %v256, %v256
  %v273 = vpack.c.b16 %v257, %v257
  %v274 = vpack.c.b16 %v258, %v258
  %v275 = vpack.c.b16 %v259, %v259
  %v276 = vpack.c.b16 %v260, %v260
  %v277 = vpack.c.b16 %v261, %v261
  %v278 = vpack.c.b16 %v262, %v262
  %v279 = vpack.c.b16 %v263, %v263
  %v280 = vpack.c.b16 %v264, %v264
  %v281 = vpack.c.b16 %v265, %v265
  %298 = vst [vmem:[%s47] sm:$0xf] %v266
  %299 = vst [vmem:[%s47 + $0x4] sm:$0xf] %v267
  %300 = vst [vmem:[%s47 + $0x8] sm:$0xf] %v268
  %301 = vst [vmem:[%s47 + $0xc] sm:$0xf] %v269
  %302 = vst [vmem:[%s47 + $0x10] sm:$0xf] %v270
  %303 = vst [vmem:[%s47 + $0x14] sm:$0xf] %v271
  %304 = vst [vmem:[%s47 + $0x18] sm:$0xf] %v272
  %305 = vst [vmem:[%s47 + $0x1c] sm:$0xf] %v273
  %306 = vst [vmem:[%s47 + $0x20] sm:$0xf] %v274
  %307 = vst [vmem:[%s47 + $0x24] sm:$0xf] %v275
  %308 = vst [vmem:[%s47 + $0x28] sm:$0xf] %v276
  %309 = vst [vmem:[%s47 + $0x2c] sm:$0xf] %v277
  %310 = vst [vmem:[%s47 + $0x30] sm:$0xf] %v278
  %311 = vst [vmem:[%s47 + $0x34] sm:$0xf] %v279
  %312 = vst [vmem:[%s47 + $0x38] sm:$0xf] %v280
  %313 = vst [vmem:[%s47 + $0x3c] sm:$0xf] %v281
  %p314 = scmp.eq.s32.totalorder 0, 0
  // Predicated region
  $region10: #{basic_block_forward.7} parent=0 // pred_check
    %p315 = pneg %p314
  $region11: #{basic_block_forward.7} parent=0 // pred_check_branch
    %317 = sbr.rel (%p315) target = $region13
  $region12: #{basic_block_forward.7} parent=0 // pred_region
    %318 = vst [vmem:[%s3] sm:$0xff] 0.0
    %319 = vst [vmem:[%s4] sm:$0xff] 0.0
  $region13: #{basic_block_forward.7} parent=0 // pred_fallthru
    _
  %v320 = vld [vmem:[%s3] sm:$0xff]
  %v321 = vadd.f32 %v172, %v175
  %v322 = vadd.f32 %v321, %v180
  %v323 = vadd.f32 %v322, %v183
  %v324 = vadd.f32 %v323, %v188
  %v325 = vadd.f32 %v324, %v191
  %v326 = vadd.f32 %v325, %v196
  %v327 = vadd.f32 %v326, %v199
  %v328 = vadd.f32 %v327, %v204
  %v329 = vadd.f32 %v328, %v207
  %v330 = vadd.f32 %v329, %v212
  %v331 = vadd.f32 %v330, %v215
  %v332 = vadd.f32 %v331, %v220
  %v333 = vadd.f32 %v332, %v223
  %v334 = vadd.f32 %v333, %v228
  %v335 = vadd.f32 %v334, %v231
  %v336 = vrot.slane %v335, 4
  %v337 = vadd.f32 %v335, %v336
  %v338 = vrot.slane %v337, 2
  %v339 = vadd.f32 %v337, %v338
  %v340 = vrot.slane %v339, 1
  %v341 = vadd.f32 %v339, %v340
  %v342 = vadd.f32 %v320, %v341
  %343 = vst [vmem:[%s3] sm:$0xff] %v342
  %v344 = vld [vmem:[%s4] sm:$0xff]
  %v345 = vmul.f32 %v172, %v172
  %v346 = vmul.f32 %v175, %v175
  %v347 = vmul.f32 %v180, %v180
  %v348 = vmul.f32 %v183, %v183
  %v349 = vmul.f32 %v188, %v188
  %v350 = vmul.f32 %v191, %v191
  %v351 = vmul.f32 %v196, %v196
  %v352 = vmul.f32 %v199, %v199
  %v353 = vmul.f32 %v204, %v204
  %v354 = vmul.f32 %v207, %v207
  %v355 = vmul.f32 %v212, %v212
  %v356 = vmul.f32 %v215, %v215
  %v357 = vmul.f32 %v220, %v220
  %v358 = vmul.f32 %v223, %v223
  %v359 = vmul.f32 %v228, %v228
  %v360 = vmul.f32 %v231, %v231
  %v361 = vadd.f32 %v345, %v346
  %v362 = vadd.f32 %v361, %v347
  %v363 = vadd.f32 %v362, %v348
  %v364 = vadd.f32 %v363, %v349
  %v365 = vadd.f32 %v364, %v350
  %v366 = vadd.f32 %v365, %v351
  %v367 = vadd.f32 %v366, %v352
  %v368 = vadd.f32 %v367, %v353
  %v369 = vadd.f32 %v368, %v354
  %v370 = vadd.f32 %v369, %v355
  %v371 = vadd.f32 %v370, %v356
  %v372 = vadd.f32 %v371, %v357
  %v373 = vadd.f32 %v372, %v358
  %v374 = vadd.f32 %v373, %v359
  %v375 = vadd.f32 %v374, %v360
  %v376 = vrot.slane %v375, 4
  %v377 = vadd.f32 %v375, %v376
  %v378 = vrot.slane %v377, 2
  %v379 = vadd.f32 %v377, %v378
  %v380 = vrot.slane %v379, 1
  %v381 = vadd.f32 %v379, %v380
  %v382 = vadd.f32 %v344, %v381
  %383 = vst [vmem:[%s4] sm:$0xff] %v382
  %s384 = sadd.s32 0, 0
  %s385 = smul.u32 16, %s384
  %p386 = scmp.lt.s32.totalorder %s385, 15
  %s387 = scalar_select %p386, %s385, 15
  %s388 = smul.addr %s387, 4
  %s389 = scalar_lea.vmem %s2, %s388
  // Predicated region
  $region14: #{basic_block_forward.7} parent=0 // pred_check
    _
  $region15: #{basic_block_forward.7} parent=0 // pred_check_branch
    %391 = sbr.rel (0) target = $region17
  $region16: #{basic_block_forward.7} parent=0 // pred_region
    %s392 = sadd.s32 0, 0
    %s393 = smul.u32 16, %s392
  $region17: #{basic_block_forward.7} parent=0 // pred_fallthru
    _
  // Predicated region
  $region18: #{basic_block_forward.7} parent=0 // pred_check
    _
  $region19: #{basic_block_forward.7} parent=0 // pred_check_branch
    %395 = sbr.rel (0) target = $region21
  $region20: #{basic_block_forward.7} parent=0 // pred_region
    _
  $region21: #{basic_block_forward.7} parent=0 // pred_fallthru
    _
  // Predicated region
  $region22: #{basic_block_forward.7} parent=0 // pred_check
    _
  $region23: #{basic_block_forward.7} parent=0 // pred_check_branch
    %397 = sbr.rel (0) target = $region25
  $region24: #{basic_block_forward.7} parent=0 // pred_region
    _
  $region25: #{basic_block_forward.7} parent=0 // pred_fallthru
    _
  // Predicated region
  $region26: #{basic_block_forward.7} parent=0 // pred_check
    _
  $region27: #{basic_block_forward.7} parent=0 // pred_check_branch
    %399 = sbr.rel (0) target = $region29
  $region28: #{basic_block_forward.7} parent=0 // pred_region
    %s400 = sadd.s32 0, 0
    %s401 = smul.u32 16, %s400
    %p402 = scmp.lt.s32.totalorder %s401, 15
    %s403 = scalar_select %p402, %s401, 15
    %s404 = smul.addr %s403, 4
    %s405 = scalar_lea.vmem %s2, %s404
  $region29: #{basic_block_forward.7} parent=0 // pred_fallthru
    _
  // Predicated region
  $region30: #{basic_block_forward.7} parent=0 // pred_check
    _
  $region31: #{basic_block_forward.7} parent=0 // pred_check_branch
    %407 = sbr.rel (0) target = $region33
  $region32: #{basic_block_forward.7} parent=0 // pred_region
    _
  $region33: #{basic_block_forward.7} parent=0 // pred_fallthru
    _
  // Predicated region
  $region34: #{basic_block_forward.7} parent=0 // pred_check
    _
  $region35: #{basic_block_forward.7} parent=0 // pred_check_branch
    %409 = sbr.rel (0) target = $region37
  $region36: #{basic_block_forward.7} parent=0 // pred_region
    _
  $region37: #{basic_block_forward.7} parent=0 // pred_fallthru
    _

// kernel: basic_block_forward.9
$region0: #{basic_block_forward.9}
  #allocation0 [shape = 'u32[]', space=smem, size = 0x4, offset = 0x4, fixed_abs, tag = 'smem constant byte address 0x4 - core index']
  #allocation1 [shape = 'u32[144,128]{1,0:T(1,128)}', space=vmem, size = 0x12000, scoped, tag = 'internal scratch']
  %s0 = inlined_call_operand.vmem [shape: bf16[128,128], index: 0, kind: input, shape index: {}]
  %s1 = inlined_call_operand.vmem [shape: f32[1,128], index: 1, kind: input, shape index: {}]
  %s2 = inlined_call_operand.vmem [shape: f32[1,128], index: 2, kind: input, shape index: {}]
  %s3 = inlined_call_operand.vmem [shape: bf16[128,128], index: 3, kind: input, shape index: {}]
  %s4 = inlined_call_operand.vmem [shape: f32[1,128], index: 4, kind: input, shape index: {}]
  %s5 = inlined_call_operand.vmem [shape: f32[1,128], index: 5, kind: input, shape index: {}]
  %s6 = inlined_call_operand.hbm [shape: f32[128,128], index: 6, kind: output, shape index: {}]
  %s7 = sld [smem:[#allocation0]]
  $region34: #{basic_block_forward.9} parent=0
    _
  %s9 = ssub.s32 1, %s7
  %s10 = scalar_select 0, %s9, %s7
  $region1: #{basic_block_forward.9} parent=0
    #allocation2 [shape = 'u8[65536]{0}', space=vmem, size = 0x10000, scoped, tag = 'output window, operand 0, single buffered']
    #allocation3 [shape = 's32[1]{0}', space=sflag, size = 0x4, scoped, tag = 'scoped memory for basic_block_forward.9']
    %11 = vsyncpa [#allocation3], 0
    // Predicated region
    $region2: #{basic_block_forward.9} parent=1 // pred_check
      _
    $region3: #{basic_block_forward.9} parent=1 // pred_check_branch
      %13 = sbr.rel (0) target = $region5
    $region4: #{basic_block_forward.9} parent=1 // pred_region
      _
    $region5: #{basic_block_forward.9} parent=1 // pred_fallthru
      _
    // Predicated region
    $region6: #{basic_block_forward.9} parent=1 // pred_check
      _
    $region7: #{basic_block_forward.9} parent=1 // pred_check_branch
      %15 = sbr.rel (0) target = $region9
    $region8: #{basic_block_forward.9} parent=1 // pred_region
      _
    $region9: #{basic_block_forward.9} parent=1 // pred_fallthru
      _
    // Predicated region
    $region10: #{basic_block_forward.9} parent=1 // pred_check
      _
    $region11: #{basic_block_forward.9} parent=1 // pred_check_branch
      %17 = sbr.rel (0) target = $region13
    $region12: #{basic_block_forward.9} parent=1 // pred_region
      _
    $region13: #{basic_block_forward.9} parent=1 // pred_fallthru
      _
    // Predicated region
    $region14: #{basic_block_forward.9} parent=1 // pred_check
      _
    $region15: #{basic_block_forward.9} parent=1 // pred_check_branch
      %19 = sbr.rel (0) target = $region17
    $region16: #{basic_block_forward.9} parent=1 // pred_region
      _
    $region17: #{basic_block_forward.9} parent=1 // pred_fallthru
      _
    // Predicated region
    $region18: #{basic_block_forward.9} parent=1 // pred_check
      _
    $region19: #{basic_block_forward.9} parent=1 // pred_check_branch
      %21 = sbr.rel (0) target = $region21
    $region20: #{basic_block_forward.9} parent=1 // pred_region
      _
    $region21: #{basic_block_forward.9} parent=1 // pred_fallthru
      _
    // Predicated region
    $region22: #{basic_block_forward.9} parent=1 // pred_check
      _
    $region23: #{basic_block_forward.9} parent=1 // pred_check_branch
      %23 = sbr.rel (0) target = $region25
    $region24: #{basic_block_forward.9} parent=1 // pred_region
      _
    $region25: #{basic_block_forward.9} parent=1 // pred_fallthru
      _
    %v24 = vld [vmem:[%s0] sm:$0xf]
    %v25 = vld [vmem:[%s0 + $0x4] sm:$0xf]
    %v26 = vld [vmem:[%s0 + $0x8] sm:$0xf]
    %v27 = vld [vmem:[%s0 + $0xc] sm:$0xf]
    %v28 = vld [vmem:[%s0 + $0x10] sm:$0xf]
    %v29 = vld [vmem:[%s0 + $0x14] sm:$0xf]
    %v30 = vld [vmem:[%s0 + $0x18] sm:$0xf]
    %v31 = vld [vmem:[%s0 + $0x1c] sm:$0xf]
    %v32 = vld [vmem:[%s0 + $0x20] sm:$0xf]
    %v33 = vld [vmem:[%s0 + $0x24] sm:$0xf]
    %v34 = vld [vmem:[%s0 + $0x28] sm:$0xf]
    %v35 = vld [vmem:[%s0 + $0x2c] sm:$0xf]
    %v36 = vld [vmem:[%s0 + $0x30] sm:$0xf]
    %v37 = vld [vmem:[%s0 + $0x34] sm:$0xf]
    %v38 = vld [vmem:[%s0 + $0x38] sm:$0xf]
    %v39 = vld [vmem:[%s0 + $0x3c] sm:$0xf]
    %v40 = vunpack.c.l.bf16 %v24
    %v41 = vunpack.c.l.bf16 %v25
    %v42 = vunpack.c.l.bf16 %v26
    %v43 = vunpack.c.l.bf16 %v27
    %v44 = vunpack.c.l.bf16 %v28
    %v45 = vunpack.c.l.bf16 %v29
    %v46 = vunpack.c.l.bf16 %v30
    %v47 = vunpack.c.l.bf16 %v31
    %v48 = vunpack.c.l.bf16 %v32
    %v49 = vunpack.c.l.bf16 %v33
    %v50 = vunpack.c.l.bf16 %v34
    %v51 = vunpack.c.l.bf16 %v35
    %v52 = vunpack.c.l.bf16 %v36
    %v53 = vunpack.c.l.bf16 %v37
    %v54 = vunpack.c.l.bf16 %v38
    %v55 = vunpack.c.l.bf16 %v39
    %v56 = vld [vmem:[%s1] sm:$0x1]
    %v58 = vlaneseq
    %v59 = vshrl.u32 %v58, 7
    %v60 = vsub.s32 0, %v59
    %v61 = vrot.slane %v56, %v60
    %v63 = vmul.f32 %v40, %v61
    %v64 = vmul.f32 %v41, %v61
    %v65 = vmul.f32 %v42, %v61
    %v66 = vmul.f32 %v43, %v61
    %v67 = vmul.f32 %v44, %v61
    %v68 = vmul.f32 %v45, %v61
    %v69 = vmul.f32 %v46, %v61
    %v70 = vmul.f32 %v47, %v61
    %v71 = vmul.f32 %v48, %v61
    %v72 = vmul.f32 %v49, %v61
    %v73 = vmul.f32 %v50, %v61
    %v74 = vmul.f32 %v51, %v61
    %v75 = vmul.f32 %v52, %v61
    %v76 = vmul.f32 %v53, %v61
    %v77 = vmul.f32 %v54, %v61
    %v78 = vmul.f32 %v55, %v61
    %v79 = vld [vmem:[%s2] sm:$0x1]
    %v81 = vlaneseq
    %v82 = vshrl.u32 %v81, 7
    %v83 = vsub.s32 0, %v82
    %v84 = vrot.slane %v79, %v83
    %v86 = vadd.f32 %v63, %v84
    %v87 = vadd.f32 %v64, %v84
    %v88 = vadd.f32 %v65, %v84
    %v89 = vadd.f32 %v66, %v84
    %v90 = vadd.f32 %v67, %v84
    %v91 = vadd.f32 %v68, %v84
    %v92 = vadd.f32 %v69, %v84
    %v93 = vadd.f32 %v70, %v84
    %v94 = vadd.f32 %v71, %v84
    %v95 = vadd.f32 %v72, %v84
    %v96 = vadd.f32 %v73, %v84
    %v97 = vadd.f32 %v74, %v84
    %v98 = vadd.f32 %v75, %v84
    %v99 = vadd.f32 %v76, %v84
    %v100 = vadd.f32 %v77, %v84
    %v101 = vadd.f32 %v78, %v84
    %v102 = vld [vmem:[%s3] sm:$0xf]
    %v103 = vld [vmem:[%s3 + $0x4] sm:$0xf]
    %v104 = vld [vmem:[%s3 + $0x8] sm:$0xf]
    %v105 = vld [vmem:[%s3 + $0xc] sm:$0xf]
    %v106 = vld [vmem:[%s3 + $0x10] sm:$0xf]
    %v107 = vld [vmem:[%s3 + $0x14] sm:$0xf]
    %v108 = vld [vmem:[%s3 + $0x18] sm:$0xf]
    %v109 = vld [vmem:[%s3 + $0x1c] sm:$0xf]
    %v110 = vld [vmem:[%s3 + $0x20] sm:$0xf]
    %v111 = vld [vmem:[%s3 + $0x24] sm:$0xf]
    %v112 = vld [vmem:[%s3 + $0x28] sm:$0xf]
    %v113 = vld [vmem:[%s3 + $0x2c] sm:$0xf]
    %v114 = vld [vmem:[%s3 + $0x30] sm:$0xf]
    %v115 = vld [vmem:[%s3 + $0x34] sm:$0xf]
    %v116 = vld [vmem:[%s3 + $0x38] sm:$0xf]
    %v117 = vld [vmem:[%s3 + $0x3c] sm:$0xf]
    %v118 = vunpack.c.l.bf16 %v102
    %v119 = vunpack.c.l.bf16 %v103
    %v120 = vunpack.c.l.bf16 %v104
    %v121 = vunpack.c.l.bf16 %v105
    %v122 = vunpack.c.l.bf16 %v106
    %v123 = vunpack.c.l.bf16 %v107
    %v124 = vunpack.c.l.bf16 %v108
    %v125 = vunpack.c.l.bf16 %v109
    %v126 = vunpack.c.l.bf16 %v110
    %v127 = vunpack.c.l.bf16 %v111
    %v128 = vunpack.c.l.bf16 %v112
    %v129 = vunpack.c.l.bf16 %v113
    %v130 = vunpack.c.l.bf16 %v114
    %v131 = vunpack.c.l.bf16 %v115
    %v132 = vunpack.c.l.bf16 %v116
    %v133 = vunpack.c.l.bf16 %v117
    %v134 = vld [vmem:[%s4] sm:$0x1]
    %v136 = vlaneseq
    %v137 = vshrl.u32 %v136, 7
    %v138 = vsub.s32 0, %v137
    %v139 = vrot.slane %v134, %v138
    %v141 = vmul.f32 %v118, %v139
    %v142 = vmul.f32 %v119, %v139
    %v143 = vmul.f32 %v120, %v139
    %v144 = vmul.f32 %v121, %v139
    %v145 = vmul.f32 %v122, %v139
    %v146 = vmul.f32 %v123, %v139
    %v147 = vmul.f32 %v124, %v139
    %v148 = vmul.f32 %v125, %v139
    %v149 = vmul.f32 %v126, %v139
    %v150 = vmul.f32 %v127, %v139
    %v151 = vmul.f32 %v128, %v139
    %v152 = vmul.f32 %v129, %v139
    %v153 = vmul.f32 %v130, %v139
    %v154 = vmul.f32 %v131, %v139
    %v155 = vmul.f32 %v132, %v139
    %v156 = vmul.f32 %v133, %v139
    %v157 = vld [vmem:[%s5] sm:$0x1]
    %v159 = vlaneseq
    %v160 = vshrl.u32 %v159, 7
    %v161 = vsub.s32 0, %v160
    %v162 = vrot.slane %v157, %v161
    %v164 = vadd.f32 %v141, %v162
    %v165 = vadd.f32 %v142, %v162
    %v166 = vadd.f32 %v143, %v162
    %v167 = vadd.f32 %v144, %v162
    %v168 = vadd.f32 %v145, %v162
    %v169 = vadd.f32 %v146, %v162
    %v170 = vadd.f32 %v147, %v162
    %v171 = vadd.f32 %v148, %v162
    %v172 = vadd.f32 %v149, %v162
    %v173 = vadd.f32 %v150, %v162
    %v174 = vadd.f32 %v151, %v162
    %v175 = vadd.f32 %v152, %v162
    %v176 = vadd.f32 %v153, %v162
    %v177 = vadd.f32 %v154, %v162
    %v178 = vadd.f32 %v155, %v162
    %v179 = vadd.f32 %v156, %v162
    %v180 = vadd.f32 %v86, %v164
    %v181 = vadd.f32 %v87, %v165
    %v182 = vadd.f32 %v88, %v166
    %v183 = vadd.f32 %v89, %v167
    %v184 = vadd.f32 %v90, %v168
    %v185 = vadd.f32 %v91, %v169
    %v186 = vadd.f32 %v92, %v170
    %v187 = vadd.f32 %v93, %v171
    %v188 = vadd.f32 %v94, %v172
    %v189 = vadd.f32 %v95, %v173
    %v190 = vadd.f32 %v96, %v174
    %v191 = vadd.f32 %v97, %v175
    %v192 = vadd.f32 %v98, %v176
    %v193 = vadd.f32 %v99, %v177
    %v194 = vadd.f32 %v100, %v178
    %v195 = vadd.f32 %v101, %v179
    %v196 = vmax.f32 %v180, 0.0
    %v197 = vmax.f32 %v181, 0.0
    %v198 = vmax.f32 %v182, 0.0
    %v199 = vmax.f32 %v183, 0.0
    %v200 = vmax.f32 %v184, 0.0
    %v201 = vmax.f32 %v185, 0.0
    %v202 = vmax.f32 %v186, 0.0
    %v203 = vmax.f32 %v187, 0.0
    %v204 = vmax.f32 %v188, 0.0
    %v205 = vmax.f32 %v189, 0.0
    %v206 = vmax.f32 %v190, 0.0
    %v207 = vmax.f32 %v191, 0.0
    %v208 = vmax.f32 %v192, 0.0
    %v209 = vmax.f32 %v193, 0.0
    %v210 = vmax.f32 %v194, 0.0
    %v211 = vmax.f32 %v195, 0.0
    %212 = vst [vmem:[#allocation2] sm:$0xff] %v196
    %213 = vst [vmem:[#allocation2 + $0x8] sm:$0xff] %v197
    %214 = vst [vmem:[#allocation2 + $0x10] sm:$0xff] %v198
    %215 = vst [vmem:[#allocation2 + $0x18] sm:$0xff] %v199
    %216 = vst [vmem:[#allocation2 + $0x20] sm:$0xff] %v200
    %217 = vst [vmem:[#allocation2 + $0x28] sm:$0xff] %v201
    %218 = vst [vmem:[#allocation2 + $0x30] sm:$0xff] %v202
    %219 = vst [vmem:[#allocation2 + $0x38] sm:$0xff] %v203
    %220 = vst [vmem:[#allocation2 + $0x40] sm:$0xff] %v204
    %221 = vst [vmem:[#allocation2 + $0x48] sm:$0xff] %v205
    %222 = vst [vmem:[#allocation2 + $0x50] sm:$0xff] %v206
    %223 = vst [vmem:[#allocation2 + $0x58] sm:$0xff] %v207
    %224 = vst [vmem:[#allocation2 + $0x60] sm:$0xff] %v208
    %225 = vst [vmem:[#allocation2 + $0x68] sm:$0xff] %v209
    %226 = vst [vmem:[#allocation2 + $0x70] sm:$0xff] %v210
    %227 = vst [vmem:[#allocation2 + $0x78] sm:$0xff] %v211
    // Predicated region
    $region26: #{basic_block_forward.9} parent=1 // pred_check
      _
    $region27: #{basic_block_forward.9} parent=1 // pred_check_branch
      %229 = sbr.rel (0) target = $region29
    $region28: #{basic_block_forward.9} parent=1 // pred_region
      %s231 = ssub.s32 2048, 2048
      %232 = vsyncadd [#allocation3], %s231
      %s233 = sshll.u32 [#allocation2], 4
      %s234 = int_to_ptr.vmem [resolvable:$true] %s233
      %239 = dma.vmem_to_hbm [thread:$0]  %s234, 2048, %s6, [#allocation3], 128, 128, 8
    $region29: #{basic_block_forward.9} parent=1 // pred_fallthru
      _
    // Predicated region
    $region30: #{basic_block_forward.9} parent=1 // pred_check
      _
    $region31: #{basic_block_forward.9} parent=1 // pred_check_branch
      %241 = sbr.rel (0) target = $region33
    $region32: #{basic_block_forward.9} parent=1 // pred_region
      %242 = dma.done [#allocation3], 2048
    $region33: #{basic_block_forward.9} parent=1 // pred_fallthru
      _
    %243 = vsyncpa [#allocation3], 1

</llo_original>
